<compile_context>
chip_gen: v6e
topology: v6e:2x2x1
jax: 0.10.0
libtpu: 0.0.40
codegen_flags: <defaults>
</compile_context>

<pallas_src>
import math
from functools import partial

import jax
import jax.numpy as jnp
from jax.experimental import pallas as pl
from jax.experimental.pallas import tpu as pltpu


def _gat_kernel(x_ref, adj_ref, w_ref, b_ref, apack_ref, o_ref, *,
                n_heads, d_head, alpha, fuse_mean, matmul_dtype):
    bt, N, d_in = x_ref.shape
    H, Dh = n_heads, d_head
    hd = H * Dh
    HN = H * N
    Dv = 1 if fuse_mean else Dh           # value width per head (1 when the mean is folded)
    HDv = H * Dv
    f32 = jnp.float32
    prec = jax.lax.Precision.HIGHEST

    def mm(lhs, rhs):
        if matmul_dtype is not None:       # fast bf16 MXU path (opt-in)
            return jnp.dot(lhs.astype(matmul_dtype), rhs.astype(matmul_dtype),
                           preferred_element_type=f32)
        return jnp.dot(lhs, rhs, preferred_element_type=f32, precision=prec)

    # ---- projection + packed attention scores: two MXU matmuls for the whole block
    x2 = x_ref[...].reshape(bt * N, d_in)
    hproj = mm(x2, w_ref[...]) + b_ref[...]                  # (bt*N, H*Dh)
    f_all = mm(hproj, apack_ref[...])                        # (bt*N, 2H): [:, :H]=a1.h, [:, H:]=a2.h

    hproj3 = hproj.reshape(bt, N, hd)
    f1 = f_all[:, :H].reshape(bt, N, H)                      # (bt, N, H)
    f2 = f_all[:, H:].reshape(bt, N, H)

    # ---- lane-packed score slab: e[b, i, h*N + j] = f1[b,i,h] + f2[b,j,h] ----
    # f1 part: broadcast column h across the N lanes of its head block.
    e1 = jnp.concatenate(
        [jnp.broadcast_to(f1[:, :, h:h + 1], (bt, N, N)) for h in range(H)], axis=2)
    # f2 part: per-graph row vector with f2 laid out along lanes, built WITHOUT a
    # transpose: pick the j'==j "diagonal" of the f2 lane-broadcast slab, reduce
    # over sublanes, broadcast down the rows.
    g2 = jnp.concatenate(
        [jnp.broadcast_to(f2[:, :, h:h + 1], (bt, N, N)) for h in range(H)], axis=2)
    sub_j = jax.lax.broadcasted_iota(jnp.int32, (1, N, N), 1)
    lane_j = jax.lax.broadcasted_iota(jnp.int32, (1, N, N), 2)
    diag = jnp.concatenate([(sub_j == lane_j).astype(f32)] * H, axis=2)   # (1, N, HN)
    e2row = jnp.sum(g2 * diag, axis=1, keepdims=True)        # (bt, 1, HN): [b,h*N+j]=f2[b,j,h]
    e = e1 + jnp.broadcast_to(e2row, (bt, N, HN))            # (bt, N, HN)

    e = jnp.where(e > 0, e, alpha * e)                       # LeakyReLU on the packed slab

    # adjacency mask (-inf like torch; edge-less rows give NaN, matching reference)
    adjf = adj_ref[...].astype(f32)                          # int8 -> f32 once
    adjc = jnp.concatenate([adjf] * H, axis=2)               # (bt, N, HN)
    e = jnp.where(adjc == 0.0, -jnp.inf, e)

    # ---- softmax over neighbours: per (row, head) group of N lanes ----
    m_slab = jnp.concatenate(
        [jnp.broadcast_to(jnp.max(e[:, :, h * N:(h + 1) * N], axis=2, keepdims=True),
                          (bt, N, N)) for h in range(H)], axis=2)
    p = jnp.exp(e - m_slab)                                  # ONE packed EUP pass

    approx = matmul_dtype is not None                        # EUP reciprocal on the fast path
    scale = jnp.concatenate(
        [jnp.broadcast_to(
            pl.reciprocal(jnp.sum(p[:, :, h * N:(h + 1) * N], axis=2, keepdims=True),
                          approx=approx),
            (bt, N, Dv)) for h in range(H)], axis=2)         # (bt, N, H*Dv)

    # ---- values: head-mean folded in for the concat_heads=False path ----
    if fuse_mean:
        vals3 = jnp.concatenate(
            [jnp.mean(hproj3[:, :, h * Dh:(h + 1) * Dh], axis=2, keepdims=True)
             for h in range(H)], axis=2)                     # (bt, N, H)
    else:
        vals3 = hproj3                                       # (bt, N, H*Dh)

    # block-diagonal value matrix: V[b, h*N+j, c] = vals3[b, j, c] iff c in head h's cols
    col = jax.lax.broadcasted_iota(jnp.int32, (1, 1, HDv), 2)
    v3 = jnp.concatenate(
        [jnp.where((col >= h * Dv) & (col < (h + 1) * Dv), vals3, 0.0) for h in range(H)],
        axis=1)                                              # (bt, H*N, H*Dv)

    # ---- one block-structured matmul per graph (batched over the block) ----
    if matmul_dtype is not None:
        o3 = jnp.einsum('bij,bjk->bik', p.astype(matmul_dtype), v3.astype(matmul_dtype),
                        preferred_element_type=f32)
    else:
        o3 = jnp.einsum('bij,bjk->bik', p, v3, preferred_element_type=f32, precision=prec)

    # fold 1/sum AFTER the matmul; store unpadded (tiny lane width, no wrapper slice)
    o_ref[...] = (o3 * scale).astype(o_ref.dtype)


def gat_layer_pallas(x, adj_hat, w_t, bias, a, *, n_heads, d_out_arg,
                     concat_heads, alpha=0.2, matmul_dtype=None):
    """x:(B,N,d_in) f32, adj_hat:(B,N,N) any dtype (int8 recommended),
    w_t:(d_in,H*d_out_arg), bias:(H*d_out_arg,), a:(H, 2*d_head)."""
    B, N, d_in = x.shape
    H = n_heads
    d_head = d_out_arg // H if concat_heads else d_out_arg
    hd = w_t.shape[1]
    assert hd == d_out_arg * H
    assert H * d_head == hd, "PyTorch .view() would fail for this configuration"

    # Pack a1|a2 block-diagonally -> one matmul yields every per-head score column.
    A_pack = jnp.zeros((hd, 2 * H), jnp.float32)
    for h in range(H):
        A_pack = A_pack.at[h * d_head:(h + 1) * d_head, h].set(a[h, :d_head])
        A_pack = A_pack.at[h * d_head:(h + 1) * d_head, H + h].set(a[h, d_head:])
    b2 = bias.reshape(1, hd).astype(jnp.float32)

    fuse_mean = not concat_heads
    Dv = 1 if fuse_mean else d_head
    out_w = H * Dv
    HN = H * N
    adj_isize = jnp.dtype(adj_hat.dtype).itemsize

    # Conservative per-graph VMEM footprint of the live slabs (f32 unless noted).
    per_graph = 4 * (N * d_in + N * hd + 7 * N * HN + HN * out_w + 3 * N * out_w) \
                + N * N * adj_isize
    weights_bytes = 4 * (w_t.size + b2.size + A_pack.size)

    # Generation-aware VMEM capacity (v7x has only 64 MiB/TC); conservative fallback.
    try:
        vmem_cap = int(pltpu.get_tpu_info().vmem_capacity_bytes)
    except Exception:
        vmem_cap = 64 * 1024 * 1024
    budget = (vmem_cap * 3) // 8

    # Graphs per grid step: amortise per-step overhead, but keep grid length >= 2
    # (v7x has 2 TensorCores) and stay inside the VMEM budget.
    bt_cap = max(1, min(B, 1024 // max(N, 1)))
    if B >= 2:
        bt_cap = min(bt_cap, B // 2)
    while bt_cap > 1 and weights_bytes + bt_cap * per_graph > budget:
        bt_cap -= 1
    bt = 1
    for cand in range(bt_cap, 0, -1):
        if B % cand == 0:
            bt = cand
            break

    blk_bytes = 2 * bt * (4 * N * d_in + N * N * adj_isize + 4 * N * out_w) \
                + 2 * weights_bytes + bt * per_graph
    cp_kwargs = dict(dimension_semantics=("parallel",))
    if blk_bytes > 16 * 1024 * 1024:                    # v5e scoped default is 16 MiB
        cp_kwargs["vmem_limit_bytes"] = int(min(blk_bytes * 3 // 2, (vmem_cap * 7) // 8))

    kernel = partial(_gat_kernel, n_heads=H, d_head=d_head, alpha=alpha,
                     fuse_mean=fuse_mean, matmul_dtype=matmul_dtype)

    cost = pl.CostEstimate(
        flops=int(2 * B * N * d_in * hd + 2 * B * N * hd * 2 * H
                  + 10 * B * N * HN + 2 * B * N * HN * out_w),
        transcendentals=int(B * N * HN),
        bytes_accessed=int(4 * x.size + adj_hat.size * adj_isize
                           + 4 * (w_t.size + bias.size + A_pack.size)
                           + 4 * B * N * out_w),
    )

    out = pl.pallas_call(
        kernel,
        out_shape=jax.ShapeDtypeStruct((B, N, out_w), jnp.float32),
        grid=(B // bt,),
        in_specs=[
            pl.BlockSpec((bt, N, d_in), lambda g: (g, 0, 0)),   # x
            pl.BlockSpec((bt, N, N), lambda g: (g, 0, 0)),      # adjacency (int8 ok)
            pl.BlockSpec((d_in, hd), lambda g: (0, 0)),         # W^T     (resident)
            pl.BlockSpec((1, hd), lambda g: (0, 0)),            # bias    (resident)
            pl.BlockSpec((hd, 2 * H), lambda g: (0, 0)),        # packed a1|a2
        ],
        out_specs=pl.BlockSpec((bt, N, out_w), lambda g: (g, 0, 0)),
        compiler_params=pltpu.CompilerParams(**cp_kwargs),
        cost_estimate=cost,
    )(x, adj_hat, w_t, b2, A_pack)
    return out   # (B, N, H*Dh) if concat_heads else (B, N, H) (head-mean fused)


# -------- pure-JAX reference mirroring the PyTorch forward verbatim --------
def gat_ref(x, adj_hat, w_t, bias, a, *, n_heads, d_head, concat_heads, alpha):
    B, N, _ = x.shape
    prec = jax.lax.Precision.HIGHEST
    h = jnp.einsum('bnd,df->bnf', x, w_t, precision=prec) + bias       # nn.Linear
    h = h.reshape(B, N, n_heads, d_head)
    p1 = jnp.repeat(h, N, axis=1)                      # repeat_interleave(N, dim=1)
    p2 = jnp.tile(h, (1, N, 1, 1))                     # repeat(1, N, 1, 1)
    p = jnp.concatenate([p1, p2], axis=-1).reshape(B, N, N, n_heads, 2 * d_head)
    e = jnp.einsum('bpqhd,hd->bpqh', p, a, precision=prec)
    e = jnp.where(e > 0, e, alpha * e)                 # LeakyReLU
    e = jnp.where(adj_hat[..., None] == 0, -jnp.inf, e)
    att = jax.nn.softmax(e, axis=-2)
    res = jnp.einsum('bmnh,bnhd->bmhd', att, h, precision=prec)
    if concat_heads:
        return res.reshape(B, N, n_heads * d_head)
    return res.mean(axis=-1)


def xavier_uniform(key, shape, gain):
    fan_out, fan_in = shape  # PyTorch convention for 2-D tensors: (dim0, dim1)
    bound = gain * math.sqrt(6.0 / (fan_in + fan_out))
    return jax.random.uniform(key, shape, jnp.float32, -bound, bound)


if __name__ == "__main__":
    key = jax.random.PRNGKey(0)
    B, N, d_in = 2, 8, 8
    alpha = 0.2

    k_x, k_adj, k_params = jax.random.split(key, 3)
    x = jax.random.normal(k_x, (B, N, d_in), jnp.float32)
    adjf = (jax.random.uniform(k_adj, (B, N, N)) > 0.5).astype(jnp.float32)
    adjf = jnp.maximum(jnp.maximum(adjf, jnp.transpose(adjf, (0, 2, 1))),
                       jnp.eye(N, dtype=jnp.float32)[None])   # symmetric + self loops
    adj = adjf.astype(jnp.int8)      # narrow adjacency: 4x less HBM DMA into the kernel

    # Configurations valid for the PyTorch module's .view():
    #   concat_heads=True requires n_heads == 1; concat_heads=False allows any n_heads.
    configs = [
        dict(d_out=16, n_heads=1, concat_heads=True),
        dict(d_out=16, n_heads=4, concat_heads=False),
    ]

    ok = True
    for i, cfg in enumerate(configs):
        d_out, H, concat = cfg["d_out"], cfg["n_heads"], cfg["concat_heads"]
        d_head = d_out // H if concat else d_out
        hd = d_out * H
        kw, kb, ka = jax.random.split(jax.random.fold_in(k_params, i), 3)
        W = xavier_uniform(kw, (hd, d_in), gain=1.414)        # torch Linear weight (out, in)
        w_t = jnp.transpose(W)                                # (d_in, hd)
        bbound = 1.0 / math.sqrt(d_in)
        bias = jax.random.uniform(kb, (hd,), jnp.float32, -bbound, bbound)
        a = xavier_uniform(ka, (H, 2 * d_head), gain=1.414)

        out = gat_layer_pallas(x, adj, w_t, bias, a, n_heads=H,
                               d_out_arg=d_out, concat_heads=concat, alpha=alpha)
        out = jax.block_until_ready(out)
        ref = gat_ref(x, adj, w_t, bias, a, n_heads=H, d_head=d_head,
                      concat_heads=concat, alpha=alpha)
        ok = ok and bool(jnp.allclose(out, ref, atol=1e-3, rtol=1e-3))

    if ok:
        print("KERNEL_OK")
    else:
        print("MISMATCH")
</pallas_src>

<mosaic_0001>
module attributes {stable_mosaic.version = 11 : i64} {
  func.func @_gat_kernel(%arg0: i32, %arg1: memref<1x8x8xf32, #tpu.memory_space<vmem>>, %arg2: memref<1x8x8xi8, #tpu.memory_space<vmem>>, %arg3: memref<8x16xf32, #tpu.memory_space<vmem>>, %arg4: memref<1x16xf32, #tpu.memory_space<vmem>>, %arg5: memref<16x2xf32, #tpu.memory_space<vmem>>, %arg6: memref<1x8x16xf32, #tpu.memory_space<vmem>>) attributes {dimension_semantics = [#tpu.dimension_semantics<parallel>], iteration_bounds = array<i64: 2>, scalar_prefetch = 0 : i64, scratch_operands = 0 : i64, tpu.core_type = #tpu.core_type<tc>, window_params = [{transform_indices = @transform_0, window_bounds = array<i64: 1, 8, 8>}, {transform_indices = @transform_1, window_bounds = array<i64: 1, 8, 8>}, {pipeline_mode = #tpu.pipeline_mode<synchronous>, transform_indices = @transform_2, window_bounds = array<i64: 8, 16>}, {pipeline_mode = #tpu.pipeline_mode<synchronous>, transform_indices = @transform_3, window_bounds = array<i64: 1, 16>}, {pipeline_mode = #tpu.pipeline_mode<synchronous>, transform_indices = @transform_4, window_bounds = array<i64: 16, 2>}, {transform_indices = @transform_5, window_bounds = array<i64: 1, 8, 16>}]} {
    %c0 = arith.constant 0 : index
    %c0_0 = arith.constant 0 : index
    %c0_1 = arith.constant 0 : index
    %0 = vector.load %arg1[%c0, %c0_0, %c0_1] : memref<1x8x8xf32, #tpu.memory_space<vmem>>, vector<1x8x8xf32>
    %1 = vector.shape_cast %0 : vector<1x8x8xf32> to vector<8x8xf32>
    %c0_2 = arith.constant 0 : index
    %c0_3 = arith.constant 0 : index
    %2 = vector.load %arg3[%c0_2, %c0_3] : memref<8x16xf32, #tpu.memory_space<vmem>>, vector<8x16xf32>
    %cst = arith.constant dense<0.000000e+00> : vector<8x16xf32>
    %3 = tpu.matmul %1, %2, %cst {dimension_numbers = #tpu.dot_dimension_numbers<[1], [0], [0], [1], [0, 0, 1, 1], [], []>, precision = #tpu.contract_precision<fp32>} : vector<8x8xf32>, vector<8x16xf32>, vector<8x16xf32> -> vector<8x16xf32>
    %c0_4 = arith.constant 0 : index
    %c0_5 = arith.constant 0 : index
    %4 = vector.load %arg4[%c0_4, %c0_5] : memref<1x16xf32, #tpu.memory_space<vmem>>, vector<1x16xf32>
    %5 = vector.broadcast %4 : vector<1x16xf32> to vector<8x16xf32>
    %6 = arith.addf %3, %5 : vector<8x16xf32>
    %c0_6 = arith.constant 0 : index
    %c0_7 = arith.constant 0 : index
    %7 = vector.load %arg5[%c0_6, %c0_7] : memref<16x2xf32, #tpu.memory_space<vmem>>, vector<16x2xf32>
    %cst_8 = arith.constant dense<0.000000e+00> : vector<8x2xf32>
    %8 = tpu.matmul %6, %7, %cst_8 {dimension_numbers = #tpu.dot_dimension_numbers<[1], [0], [0], [1], [0, 0, 1, 1], [], []>, precision = #tpu.contract_precision<fp32>} : vector<8x16xf32>, vector<16x2xf32>, vector<8x2xf32> -> vector<8x2xf32>
    %9 = vector.shape_cast %6 : vector<8x16xf32> to vector<1x8x16xf32>
    %10 = vector.extract_strided_slice %8 {offsets = [0, 0], sizes = [8, 1], strides = [1, 1]} : vector<8x2xf32> to vector<8x1xf32>
    %11 = vector.shape_cast %10 : vector<8x1xf32> to vector<1x8x1xf32>
    %12 = vector.extract_strided_slice %8 {offsets = [0, 1], sizes = [8, 1], strides = [1, 1]} : vector<8x2xf32> to vector<8x1xf32>
    %13 = vector.shape_cast %12 : vector<8x1xf32> to vector<1x8x1xf32>
    %14 = vector.shape_cast %11 : vector<1x8x1xf32> to vector<1x8x1xf32>
    %15 = vector.broadcast %14 : vector<1x8x1xf32> to vector<1x8x8xf32>
    %16 = vector.shape_cast %13 : vector<1x8x1xf32> to vector<1x8x1xf32>
    %17 = vector.broadcast %16 : vector<1x8x1xf32> to vector<1x8x8xf32>
    %18 = tpu.iota {dimensions = array<i32: 1>} : vector<1x8x8xi32>
    %19 = tpu.iota {dimensions = array<i32: 2>} : vector<1x8x8xi32>
    %20 = arith.cmpi eq, %18, %19 : vector<1x8x8xi32>
    %21 = arith.extui %20 : vector<1x8x8xi1> to vector<1x8x8xi32>
    %22 = arith.sitofp %21 : vector<1x8x8xi32> to vector<1x8x8xf32>
    %23 = arith.mulf %17, %22 : vector<1x8x8xf32>
    %cst_9 = arith.constant dense<0.000000e+00> : vector<1x8xf32>
    %24 = vector.multi_reduction <add>, %23, %cst_9 [1] : vector<1x8x8xf32> to vector<1x8xf32>
    %25 = vector.shape_cast %24 : vector<1x8xf32> to vector<1x1x8xf32>
    %26 = vector.shape_cast %25 : vector<1x1x8xf32> to vector<1x1x8xf32>
    %27 = vector.broadcast %26 : vector<1x1x8xf32> to vector<1x8x8xf32>
    %28 = arith.addf %15, %27 : vector<1x8x8xf32>
    %cst_10 = arith.constant 0.000000e+00 : f32
    %29 = vector.broadcast %cst_10 : f32 to vector<1x8x8xf32>
    %30 = arith.cmpf ogt, %28, %29 : vector<1x8x8xf32>
    %cst_11 = arith.constant 2.000000e-01 : f32
    %31 = vector.broadcast %cst_11 : f32 to vector<1x8x8xf32>
    %32 = arith.mulf %31, %28 : vector<1x8x8xf32>
    %33 = arith.select %30, %28, %32 : vector<1x8x8xi1>, vector<1x8x8xf32>
    %c0_12 = arith.constant 0 : index
    %c0_13 = arith.constant 0 : index
    %c0_14 = arith.constant 0 : index
    %34 = vector.load %arg2[%c0_12, %c0_13, %c0_14] : memref<1x8x8xi8, #tpu.memory_space<vmem>>, vector<1x8x8xi8>
    %35 = arith.sitofp %34 : vector<1x8x8xi8> to vector<1x8x8xf32>
    %cst_15 = arith.constant 0.000000e+00 : f32
    %36 = vector.broadcast %cst_15 : f32 to vector<1x8x8xf32>
    %37 = arith.cmpf oeq, %35, %36 : vector<1x8x8xf32>
    %cst_16 = arith.constant 0xFF800000 : f32
    %38 = vector.broadcast %cst_16 : f32 to vector<1x8x8xf32>
    %39 = arith.select %37, %38, %33 : vector<1x8x8xi1>, vector<1x8x8xf32>
    %cst_17 = arith.constant dense<0xFF800000> : vector<1x8xf32>
    %40 = vector.multi_reduction <maximumf>, %39, %cst_17 [2] : vector<1x8x8xf32> to vector<1x8xf32>
    %41 = vector.shape_cast %40 : vector<1x8xf32> to vector<1x8x1xf32>
    %42 = vector.shape_cast %41 : vector<1x8x1xf32> to vector<1x8x1xf32>
    %43 = vector.broadcast %42 : vector<1x8x1xf32> to vector<1x8x8xf32>
    %44 = arith.subf %39, %43 : vector<1x8x8xf32>
    %45 = math.exp %44 : vector<1x8x8xf32>
    %cst_18 = arith.constant dense<0.000000e+00> : vector<1x8xf32>
    %46 = vector.multi_reduction <add>, %45, %cst_18 [2] : vector<1x8x8xf32> to vector<1x8xf32>
    %47 = vector.shape_cast %46 : vector<1x8xf32> to vector<1x8x1xf32>
    %48 = tpu.reciprocal %47 : vector<1x8x1xf32> -> vector<1x8x1xf32>
    %49 = vector.shape_cast %48 : vector<1x8x1xf32> to vector<1x8x1xf32>
    %50 = vector.broadcast %49 : vector<1x8x1xf32> to vector<1x8x16xf32>
    %51 = tpu.iota {dimensions = array<i32: 2>} : vector<1x1x16xi32>
    %c0_i32 = arith.constant 0 : i32
    %52 = vector.broadcast %c0_i32 : i32 to vector<1x1x16xi32>
    %53 = arith.cmpi sge, %51, %52 : vector<1x1x16xi32>
    %c16_i32 = arith.constant 16 : i32
    %54 = vector.broadcast %c16_i32 : i32 to vector<1x1x16xi32>
    %55 = arith.cmpi slt, %51, %54 : vector<1x1x16xi32>
    %56 = arith.andi %53, %55 : vector<1x1x16xi1>
    %cst_19 = arith.constant 0.000000e+00 : f32
    %57 = vector.shape_cast %56 : vector<1x1x16xi1> to vector<1x1x16xi1>
    %58 = vector.broadcast %57 : vector<1x1x16xi1> to vector<1x8x16xi1>
    %59 = vector.broadcast %cst_19 : f32 to vector<1x8x16xf32>
    %60 = arith.select %58, %9, %59 : vector<1x8x16xi1>, vector<1x8x16xf32>
    "tpu.trace_start"() <{level = 10 : i32, message = "bij,bjk->bik"}> : () -> ()
    %cst_20 = arith.constant dense<0.000000e+00> : vector<1x8x16xf32>
    %61 = tpu.matmul %45, %60, %cst_20 {dimension_numbers = #tpu.dot_dimension_numbers<[2], [1], [1], [2], [0, 0, 0, 1, 1, 2], [0], [0]>, precision = #tpu.contract_precision<fp32>} : vector<1x8x8xf32>, vector<1x8x16xf32>, vector<1x8x16xf32> -> vector<1x8x16xf32>
    "tpu.trace_stop"() : () -> ()
    %62 = arith.mulf %61, %50 : vector<1x8x16xf32>
    %c0_21 = arith.constant 0 : index
    %c0_22 = arith.constant 0 : index
    %c0_23 = arith.constant 0 : index
    %63 = vector.load %arg6[%c0_21, %c0_22, %c0_23] : memref<1x8x16xf32, #tpu.memory_space<vmem>>, vector<1x8x16xf32>
    tpu.vector_store %arg6[%c0_21, %c0_22, %c0_23], %62 {strides = array<i32>} : memref<1x8x16xf32, #tpu.memory_space<vmem>>, vector<1x8x16xf32>,
    return
  }
  func.func @transform_0(%arg0: i32) -> (i32, i32, i32) {
    %c0_i32 = arith.constant 0 : i32
    %c0_i32_0 = arith.constant 0 : i32
    %c0_i32_1 = arith.constant 0 : i32
    return %arg0, %c0_i32, %c0_i32_0 : i32, i32, i32
  }
  func.func @transform_1(%arg0: i32) -> (i32, i32, i32) {
    %c0_i32 = arith.constant 0 : i32
    %c0_i32_0 = arith.constant 0 : i32
    %c0_i32_1 = arith.constant 0 : i32
    return %arg0, %c0_i32, %c0_i32_0 : i32, i32, i32
  }
  func.func @transform_2(%arg0: i32) -> (i32, i32) {
    %c0_i32 = arith.constant 0 : i32
    %c0_i32_0 = arith.constant 0 : i32
    %c0_i32_1 = arith.constant 0 : i32
    return %c0_i32, %c0_i32_0 : i32, i32
  }
  func.func @transform_3(%arg0: i32) -> (i32, i32) {
    %c0_i32 = arith.constant 0 : i32
    %c0_i32_0 = arith.constant 0 : i32
    %c0_i32_1 = arith.constant 0 : i32
    return %c0_i32, %c0_i32_0 : i32, i32
  }
  func.func @transform_4(%arg0: i32) -> (i32, i32) {
    %c0_i32 = arith.constant 0 : i32
    %c0_i32_0 = arith.constant 0 : i32
    %c0_i32_1 = arith.constant 0 : i32
    return %c0_i32, %c0_i32_0 : i32, i32
  }
  func.func @transform_5(%arg0: i32) -> (i32, i32, i32) {
    %c0_i32 = arith.constant 0 : i32
    %c0_i32_0 = arith.constant 0 : i32
    %c0_i32_1 = arith.constant 0 : i32
    return %arg0, %c0_i32, %c0_i32_0 : i32, i32, i32
  }
}

</mosaic_0001>

<llo_original>
// kernel: tpu_custom_call.1
$region0: #{tpu_custom_call.1}
  #allocation0 [shape = 'u32[]', space=smem, size = 0x4, offset = 0x4, fixed_abs, tag = 'smem constant byte address 0x4 - core index']
  #allocation1 [shape = 'u32[144,128]{1,0:T(1,128)}', space=vmem, size = 0x12000, scoped, tag = 'internal scratch']
  %s0 = inlined_call_operand.vmem [shape: f32[2,8,8], index: 0, kind: input, shape index: {}]
  %s1 = inlined_call_operand.hbm [shape: s8[2,8,8], index: 1, kind: input, shape index: {}]
  %s2 = inlined_call_operand.hbm [shape: f32[8,16], index: 2, kind: input, shape index: {}]
  %s3 = inlined_call_operand.vmem [shape: f32[1,16], index: 3, kind: input, shape index: {}]
  %s4 = inlined_call_operand.vmem [shape: f32[16,2], index: 4, kind: input, shape index: {}]
  %s5 = inlined_call_operand.hbm [shape: f32[2,8,16], index: 5, kind: output, shape index: {}]
  %s6 = sld [smem:[#allocation0]]
  $region61: #{tpu_custom_call.1} parent=0
    _
  %s8 = ssub.s32 1, %s6
  %s9 = scalar_select 0, %s8, %s6
  $region1: #{tpu_custom_call.1} parent=0
    #allocation2 [shape = 'u8[2048]{0}', space=vmem, size = 0x800, scoped, tag = 'input window, operand 1']
    #allocation3 [shape = 's32[2]{0}', space=sflag, size = 0x8, scoped, tag = 'scoped memory for tpu_custom_call.1']
    #allocation4 [shape = 's32[2]{0}', space=sflag, size = 0x8, scoped, tag = 'scoped memory for tpu_custom_call.1']
    #allocation5 [shape = 'u8[4096]{0}', space=vmem, size = 0x1000, scoped, tag = 'input window, operand 2, single buffered']
    #allocation6 [shape = 's32[1]{0}', space=sflag, size = 0x4, scoped, tag = 'scoped memory for tpu_custom_call.1']
    #allocation7 [shape = 'u8[8192]{0}', space=vmem, size = 0x2000, scoped, tag = 'output window, operand 0']
    %10 = vsyncpa [#allocation3], 0
    %s11 = scalar_lea.sflag [#allocation3], 1
    %12 = vsyncpa %s11, 0
    %13 = vsyncpa [#allocation6], 0
    %14 = vsyncpa [#allocation4], 0
    %s15 = scalar_lea.sflag [#allocation4], 1
    %16 = vsyncpa %s15, 0
    loop: start=0, step=1, limit=4
    $region2: #{tpu_custom_call.1} parent=1 // loop_pre_header
      _
    $region3: #{tpu_custom_call.1} parent=1 // loop_header
      %s18 = sphi 0, %s22
      %p19 = scmp.ge.s32.totalorder %s18, 4
      %s28 = sphi 0, %s30
      %s31 = sphi 0, %s28
      %s32 = sphi 0, %s31
      %s48 = sphi 0, %s32
      %s54 = sphi 0, %s56
      %s57 = sphi 0, %s54
      %s58 = sphi 0, %s57
      %s74 = sphi 0, %s58
      %s78 = sphi 0, %s78
      %s80 = sphi 0, %s78
      %s81 = sphi 0, %s80
      %s95 = sphi 0, %s81
      %s99 = sphi 0, %s99
      %s101 = sphi 0, %s99
      %s102 = sphi 0, %s101
      %s116 = sphi 0, %s102
      %s120 = sphi 0, %s120
      %s122 = sphi 0, %s120
      %s123 = sphi 0, %s122
      %s137 = sphi 0, %s123
      %s143 = sphi 0, %s145
      %s146 = sphi 0, %s143
      %s147 = sphi 0, %s146
      %s163 = sphi 0, %s147
    $region4: #{tpu_custom_call.1} parent=1 // loop_header_branch
      %21 = sbr.rel (%p19) target = $region8
    $region5: #{tpu_custom_call.1} parent=1 // loop_body
      %s23 = ssub.s32 %s18, 1
      %s24 = ssub.s32 %s18, 2
      %s25 = sadd.s32 %s18, 1
      %s26 = ssub.s32 %s18, %s25
      %p27 = scmp.eq.s32.totalorder %s26, 0
      %s29 = sadd.s32 %s28, 1
      %s30 = scalar_select %p27, %s28, %s29
      %p33 = pneg %p27
      %p34 = scmp.eq.s32.totalorder %s18, 1
      %p35 = por %p33, %p34
      %p36 = scmp.ne.s32.totalorder %s28, %s31
      %p37 = scmp.eq.s32.totalorder %s18, 0
      %p38 = por %p36, %p37
      %p39 = scmp.ne.s32.totalorder %s28, %s31
      %p40 = scmp.eq.s32.totalorder %s23, 1
      %p41 = por %p39, %p40
      %p42 = scmp.ne.s32.totalorder %s31, %s32
      %p43 = scmp.eq.s32.totalorder %s23, 0
      %p44 = por %p42, %p43
      %p45 = scmp.ne.s32.totalorder %s31, %s32
      %p46 = scmp.eq.s32.totalorder %s24, 1
      %p47 = por %p45, %p46
      %p49 = scmp.ne.s32.totalorder %s32, %s48
      %p50 = scmp.eq.s32.totalorder %s24, 0
      %p51 = por %p49, %p50
      %s52 = ssub.s32 %s18, %s25
      %p53 = scmp.eq.s32.totalorder %s52, 0
      %s55 = sadd.s32 %s54, 1
      %s56 = scalar_select %p53, %s54, %s55
      %p59 = pneg %p53
      %p60 = scmp.eq.s32.totalorder %s18, 1
      %p61 = por %p59, %p60
      %p62 = scmp.ne.s32.totalorder %s54, %s57
      %p63 = scmp.eq.s32.totalorder %s18, 0
      %p64 = por %p62, %p63
      %p65 = scmp.ne.s32.totalorder %s54, %s57
      %p66 = scmp.eq.s32.totalorder %s23, 1
      %p67 = por %p65, %p66
      %p68 = scmp.ne.s32.totalorder %s57, %s58
      %p69 = scmp.eq.s32.totalorder %s23, 0
      %p70 = por %p68, %p69
      %p71 = scmp.ne.s32.totalorder %s57, %s58
      %p72 = scmp.eq.s32.totalorder %s24, 1
      %p73 = por %p71, %p72
      %p75 = scmp.ne.s32.totalorder %s58, %s74
      %p76 = scmp.eq.s32.totalorder %s24, 0
      %p77 = por %p75, %p76
      %s79 = sadd.s32 %s78, 1
      %p82 = scmp.eq.s32.totalorder %s18, 1
      %p83 = scmp.ne.s32.totalorder %s78, %s80
      %p84 = scmp.eq.s32.totalorder %s18, 0
      %p85 = por %p83, %p84
      %p86 = scmp.ne.s32.totalorder %s78, %s80
      %p87 = scmp.eq.s32.totalorder %s23, 1
      %p88 = por %p86, %p87
      %p89 = scmp.ne.s32.totalorder %s80, %s81
      %p90 = scmp.eq.s32.totalorder %s23, 0
      %p91 = por %p89, %p90
      %p92 = scmp.ne.s32.totalorder %s80, %s81
      %p93 = scmp.eq.s32.totalorder %s24, 1
      %p94 = por %p92, %p93
      %p96 = scmp.ne.s32.totalorder %s81, %s95
      %p97 = scmp.eq.s32.totalorder %s24, 0
      %p98 = por %p96, %p97
      %s100 = sadd.s32 %s99, 1
      %p103 = scmp.eq.s32.totalorder %s18, 1
      %p104 = scmp.ne.s32.totalorder %s99, %s101
      %p105 = scmp.eq.s32.totalorder %s18, 0
      %p106 = por %p104, %p105
      %p107 = scmp.ne.s32.totalorder %s99, %s101
      %p108 = scmp.eq.s32.totalorder %s23, 1
      %p109 = por %p107, %p108
      %p110 = scmp.ne.s32.totalorder %s101, %s102
      %p111 = scmp.eq.s32.totalorder %s23, 0
      %p112 = por %p110, %p111
      %p113 = scmp.ne.s32.totalorder %s101, %s102
      %p114 = scmp.eq.s32.totalorder %s24, 1
      %p115 = por %p113, %p114
      %p117 = scmp.ne.s32.totalorder %s102, %s116
      %p118 = scmp.eq.s32.totalorder %s24, 0
      %p119 = por %p117, %p118
      %s121 = sadd.s32 %s120, 1
      %p124 = scmp.eq.s32.totalorder %s18, 1
      %p125 = scmp.ne.s32.totalorder %s120, %s122
      %p126 = scmp.eq.s32.totalorder %s18, 0
      %p127 = por %p125, %p126
      %p128 = scmp.ne.s32.totalorder %s120, %s122
      %p129 = scmp.eq.s32.totalorder %s23, 1
      %p130 = por %p128, %p129
      %p131 = scmp.ne.s32.totalorder %s122, %s123
      %p132 = scmp.eq.s32.totalorder %s23, 0
      %p133 = por %p131, %p132
      %p134 = scmp.ne.s32.totalorder %s122, %s123
      %p135 = scmp.eq.s32.totalorder %s24, 1
      %p136 = por %p134, %p135
      %p138 = scmp.ne.s32.totalorder %s123, %s137
      %p139 = scmp.eq.s32.totalorder %s24, 0
      %p140 = por %p138, %p139
      %s141 = ssub.s32 %s18, %s25
      %p142 = scmp.eq.s32.totalorder %s141, 0
      %s144 = sadd.s32 %s143, 1
      %s145 = scalar_select %p142, %s143, %s144
      %p148 = pneg %p142
      %p149 = scmp.eq.s32.totalorder %s18, 1
      %p150 = por %p148, %p149
      %p151 = scmp.ne.s32.totalorder %s143, %s146
      %p152 = scmp.eq.s32.totalorder %s18, 0
      %p153 = por %p151, %p152
      %p154 = scmp.ne.s32.totalorder %s143, %s146
      %p155 = scmp.eq.s32.totalorder %s23, 1
      %p156 = por %p154, %p155
      %p157 = scmp.ne.s32.totalorder %s146, %s147
      %p158 = scmp.eq.s32.totalorder %s23, 0
      %p159 = por %p157, %p158
      %p160 = scmp.ne.s32.totalorder %s146, %s147
      %p161 = scmp.eq.s32.totalorder %s24, 1
      %p162 = por %p160, %p161
      %p164 = scmp.ne.s32.totalorder %s147, %s163
      %p165 = scmp.eq.s32.totalorder %s24, 0
      %p166 = por %p164, %p165
      %p167 = scmp.le.s32.totalorder 1, %s18
      %p168 = scmp.lt.s32.totalorder %s18, 3
      %p169 = pnand %p167, %p168
      %p170 = pneg %p169
      // Predicated region
      $region9: #{tpu_custom_call.1} parent=5 // pred_check
        _
      $region10: #{tpu_custom_call.1} parent=5 // pred_check_branch
        %172 = sbr.rel (%p169) target = $region12
      $region11: #{tpu_custom_call.1} parent=5 // pred_region
        %s173 = ssub.s32 %s18, 1
        // Predicated region
        $region13: #{tpu_custom_call.1} parent=11 // pred_check
          %p174 = pneg %p91
        $region14: #{tpu_custom_call.1} parent=11 // pred_check_branch
          %176 = sbr.rel (%p174) target = $region16
        $region15: #{tpu_custom_call.1} parent=11 // pred_region
          %s178 = ssub.s32 128, 128
          %179 = vsyncadd [#allocation6], %s178
          %s181 = sshll.u32 [#allocation5], 4
          %s182 = int_to_ptr.vmem [resolvable:$true] %s181
          %184 = dma.hbm_to_vmem [thread:$0]  %s2, 128, %s182, [#allocation6]
        $region16: #{tpu_custom_call.1} parent=11 // pred_fallthru
          _
        // Predicated region
        $region17: #{tpu_custom_call.1} parent=11 // pred_check
          %p185 = pneg %p112
        $region18: #{tpu_custom_call.1} parent=11 // pred_check_branch
          %187 = sbr.rel (%p185) target = $region20
        $region19: #{tpu_custom_call.1} parent=11 // pred_region
          _
        $region20: #{tpu_custom_call.1} parent=11 // pred_fallthru
          _
        // Predicated region
        $region21: #{tpu_custom_call.1} parent=11 // pred_check
          %p188 = pneg %p133
        $region22: #{tpu_custom_call.1} parent=11 // pred_check_branch
          %190 = sbr.rel (%p188) target = $region24
        $region23: #{tpu_custom_call.1} parent=11 // pred_region
          _
        $region24: #{tpu_custom_call.1} parent=11 // pred_fallthru
          _
      $region12: #{tpu_custom_call.1} parent=5 // pred_fallthru
        _
      %p191 = scmp.lt.s32.totalorder %s18, 2
      // Predicated region
      $region25: #{tpu_custom_call.1} parent=5 // pred_check
        %p192 = pneg %p191
      $region26: #{tpu_custom_call.1} parent=5 // pred_check_branch
        %194 = sbr.rel (%p192) target = $region28
      $region27: #{tpu_custom_call.1} parent=5 // pred_region
        // Predicated region
        $region29: #{tpu_custom_call.1} parent=27 // pred_check
          %p195 = pneg %p38
        $region30: #{tpu_custom_call.1} parent=27 // pred_check_branch
          %197 = sbr.rel (%p195) target = $region32
        $region31: #{tpu_custom_call.1} parent=27 // pred_region
          %p198 = scmp.lt.s32.totalorder %s18, 1
          %s199 = scalar_select %p198, %s18, 1
          %s200 = smul.addr %s199, 8
          %s201 = scalar_lea.vmem %s0, %s200
        $region32: #{tpu_custom_call.1} parent=27 // pred_fallthru
          _
        // Predicated region
        $region33: #{tpu_custom_call.1} parent=27 // pred_check
          %p202 = pneg %p64
        $region34: #{tpu_custom_call.1} parent=27 // pred_check_branch
          %204 = sbr.rel (%p202) target = $region36
        $region35: #{tpu_custom_call.1} parent=27 // pred_region
          %s205 = sand.u32 %s54, 1
          %s206 = scalar_lea.sflag [#allocation3], %s205
          %s207 = sand.u32 %s54, 1
          %s208 = smul.addr %s207, 2
          %s209 = scalar_lea.vmem [#allocation2], %s208
          %s211 = ssub.s32 32, 32
          %212 = vsyncadd %s206, %s211
          %s213 = smul.addr %s18, 32
          %s214 = scalar_lea.hbm %s1, %s213
          %s216 = sshll.u32 %s209, 4
          %s217 = int_to_ptr.vmem [resolvable:$true] %s216
          %219 = dma.hbm_to_vmem [thread:$0]  %s214, 32, %s217, %s206
        $region36: #{tpu_custom_call.1} parent=27 // pred_fallthru
          _
      $region28: #{tpu_custom_call.1} parent=5 // pred_fallthru
        _
      %p220 = scmp.le.s32.totalorder 1, %s18
      %p221 = scmp.lt.s32.totalorder %s18, 3
      %p222 = pnand %p220, %p221
      %p223 = pneg %p222
      // Predicated region
      $region37: #{tpu_custom_call.1} parent=5 // pred_check
        _
      $region38: #{tpu_custom_call.1} parent=5 // pred_check_branch
        %225 = sbr.rel (%p222) target = $region40
      $region39: #{tpu_custom_call.1} parent=5 // pred_region
        %s226 = ssub.s32 %s18, 1
        %s227 = sand.u32 %s57, 1
        %s228 = scalar_lea.sflag [#allocation3], %s227
        %s229 = sand.u32 %s57, 1
        %s230 = smul.addr %s229, 2
        %s231 = scalar_lea.vmem [#allocation2], %s230
        // Predicated region
        $region41: #{tpu_custom_call.1} parent=39 // pred_check
          %p232 = pneg %p70
        $region42: #{tpu_custom_call.1} parent=39 // pred_check_branch
          %234 = sbr.rel (%p232) target = $region44
        $region43: #{tpu_custom_call.1} parent=39 // pred_region
          %235 = dma.done %s228, 32
        $region44: #{tpu_custom_call.1} parent=39 // pred_fallthru
          _
        // Predicated region
        $region45: #{tpu_custom_call.1} parent=39 // pred_check
          %p236 = pneg %p91
        $region46: #{tpu_custom_call.1} parent=39 // pred_check_branch
          %238 = sbr.rel (%p236) target = $region48
        $region47: #{tpu_custom_call.1} parent=39 // pred_region
          %239 = dma.done [#allocation6], 128
        $region48: #{tpu_custom_call.1} parent=39 // pred_fallthru
          _
        %p240 = scmp.lt.s32.totalorder %s23, 1
        %s241 = scalar_select %p240, %s23, 1
        %s242 = smul.addr %s241, 8
        %s243 = scalar_lea.vmem %s0, %s242
        %p244 = pneg %p44
        %p245 = pneg %p41
        %s246 = sand.u32 %s57, 1
        %s247 = scalar_lea.sflag [#allocation3], %s246
        %s248 = sand.u32 %s57, 1
        %s249 = smul.addr %s248, 2
        %s250 = scalar_lea.vmem [#allocation2], %s249
        %p251 = pneg %p70
        %p252 = pneg %p67
        %p253 = pneg %p91
        %p254 = pneg %p88
        %p255 = pneg %p112
        %p256 = pneg %p109
        %p257 = pneg %p133
        %p258 = pneg %p130
        %p259 = pneg %p159
        %p260 = pneg %p156
        %s261 = sand.u32 %s146, 1
        %s262 = scalar_lea.sflag [#allocation4], %s261
        %s263 = sand.u32 %s146, 1
        %s264 = smul.addr %s263, 8
        %s265 = scalar_lea.vmem [#allocation7], %s264
        %p266 = scmp.lt.s32.totalorder %s23, 1
        %s267 = scalar_select %p266, %s23, 1
        %s268 = smul.addr %s267, 8
        %s269 = scalar_lea.vmem %s0, %s268
        %v270 = vld [vmem:[%s269] sm:$0xff]
        %v271 = vld [vmem:[#allocation5] sm:$0xff]
        %v272 = vld [vmem:[%s3] sm:$0x1]
        %v274 = vlaneseq
        %v275 = vshrl.u32 %v274, 7
        %v276 = vsub.s32 0, %v275
        %v277 = vrot.slane %v272, %v276
        %vm279 = vcmask 64512
        %v281 = vsel %vm279, %v270, 0
        %283 = vmatprep.subr.mxu0 0.0
        %284 = vmatpush1.msra.mxu0 0.0
        %285 = vmatprep.subr.mxu0 0.0
        %286 = vmatpush1.msra.mxu0 0.0
        %287 = vmatprep.subr.mxu0 0.0
        %288 = vmatpush1.msra.mxu0 0.0
        %289 = vmatprep.subr.mxu0 0.0
        %290 = vmatpush1.msra.mxu0 0.0
        %291 = vmatprep.subr.mxu0 0.0
        %292 = vmatpush1.msra.mxu0 0.0
        %293 = vmatprep.subr.mxu0 0.0
        %294 = vmatpush1.msra.mxu0 0.0
        %295 = vmatprep.subr.mxu0 0.0
        %296 = vmatpush1.msra.mxu0 0.0
        %297 = vmatprep.subr.mxu0 0.0
        %298 = vmatpush1.msra.mxu0 0.0
        %299 = vmatprep.subr.mxu0 0.0
        %300 = vmatpush1.msra.mxu0 0.0
        %301 = vmatprep.subr.mxu0 0.0
        %302 = vmatpush1.msra.mxu0 0.0
        %303 = vmatprep.subr.mxu0 0.0
        %304 = vmatpush1.msra.mxu0 0.0
        %305 = vmatprep.subr.mxu0 0.0
        %306 = vmatpush1.msra.mxu0 0.0
        %307 = vmatprep.subr.mxu0 0.0
        %308 = vmatpush1.msra.mxu0 0.0
        %309 = vmatprep.subr.mxu0 0.0
        %310 = vmatpush1.msra.mxu0 0.0
        %311 = vmatprep.subr.mxu0 0.0
        %312 = vmatpush1.msra.mxu0 0.0
        %313 = vmatprep.subr.mxu0 0.0
        %v314 = vand.u32 %v271, 4294901760
        %315 = vmatpush1.msra.mxu0 %v314
        %316 = vmatprep.subr.mxu0 0.0
        %317 = vmatpush2.msra.mxu0 0.0
        %318 = vmatprep.subr.mxu0 0.0
        %319 = vmatpush2.msra.mxu0 0.0
        %320 = vmatprep.subr.mxu0 0.0
        %321 = vmatpush2.msra.mxu0 0.0
        %322 = vmatprep.subr.mxu0 0.0
        %323 = vmatpush2.msra.mxu0 0.0
        %324 = vmatprep.subr.mxu0 0.0
        %325 = vmatpush2.msra.mxu0 0.0
        %326 = vmatprep.subr.mxu0 0.0
        %327 = vmatpush2.msra.mxu0 0.0
        %328 = vmatprep.subr.mxu0 0.0
        %329 = vmatpush2.msra.mxu0 0.0
        %330 = vmatprep.subr.mxu0 0.0
        %331 = vmatpush2.msra.mxu0 0.0
        %332 = vmatprep.subr.mxu0 0.0
        %333 = vmatpush2.msra.mxu0 0.0
        %334 = vmatprep.subr.mxu0 0.0
        %335 = vmatpush2.msra.mxu0 0.0
        %336 = vmatprep.subr.mxu0 0.0
        %337 = vmatpush2.msra.mxu0 0.0
        %338 = vmatprep.subr.mxu0 0.0
        %339 = vmatpush2.msra.mxu0 0.0
        %340 = vmatprep.subr.mxu0 0.0
        %341 = vmatpush2.msra.mxu0 0.0
        %342 = vmatprep.subr.mxu0 0.0
        %343 = vmatpush2.msra.mxu0 0.0
        %344 = vmatprep.subr.mxu0 0.0
        %345 = vmatpush2.msra.mxu0 0.0
        %346 = vmatprep.subr.mxu0 0.0
        %347 = vmatpush2.msra.mxu0 0.0
        %348 = vmatprep.mubr.f32.mxu0 0.0
        %v349 = vand.u32 %v281, 4294901760
        %v350 = vsub.f32 %v281, %v349
        %v351 = vand.u32 %v350, 4294901760
        %v352 = vsub.f32 %v350, %v351
        %v353 = vand.u32 %v352, 4294901760
        %354 = vmatmul.mubr.f32.gmra.mxu0 %v353
        %v355 = vpop.f32.mrf.mxu0
        %v356 = vadd.f32 %v277, %v355
        %v357 = vpop.f32.mrf.mxu0
        %358 = vdwg.mxu0
        %359 = vmatprep.subr.mxu0 0.0
        %360 = vmatpush1.msra.mxu0 0.0
        %361 = vmatprep.subr.mxu0 0.0
        %362 = vmatpush1.msra.mxu0 0.0
        %363 = vmatprep.subr.mxu0 0.0
        %364 = vmatpush1.msra.mxu0 0.0
        %365 = vmatprep.subr.mxu0 0.0
        %366 = vmatpush1.msra.mxu0 0.0
        %367 = vmatprep.subr.mxu0 0.0
        %368 = vmatpush1.msra.mxu0 0.0
        %369 = vmatprep.subr.mxu0 0.0
        %370 = vmatpush1.msra.mxu0 0.0
        %371 = vmatprep.subr.mxu0 0.0
        %372 = vmatpush1.msra.mxu0 0.0
        %373 = vmatprep.subr.mxu0 0.0
        %374 = vmatpush1.msra.mxu0 0.0
        %375 = vmatprep.subr.mxu0 0.0
        %376 = vmatpush1.msra.mxu0 0.0
        %377 = vmatprep.subr.mxu0 0.0
        %378 = vmatpush1.msra.mxu0 0.0
        %379 = vmatprep.subr.mxu0 0.0
        %380 = vmatpush1.msra.mxu0 0.0
        %381 = vmatprep.subr.mxu0 0.0
        %382 = vmatpush1.msra.mxu0 0.0
        %383 = vmatprep.subr.mxu0 0.0
        %384 = vmatpush1.msra.mxu0 0.0
        %385 = vmatprep.subr.mxu0 0.0
        %386 = vmatpush1.msra.mxu0 0.0
        %387 = vmatprep.subr.mxu0 0.0
        %388 = vmatpush1.msra.mxu0 0.0
        %389 = vmatprep.subr.mxu0 0.0
        %v390 = vand.u32 %v271, 4294901760
        %v391 = vsub.f32 %v271, %v390
        %v392 = vand.u32 %v391, 4294901760
        %v393 = vsub.f32 %v391, %v392
        %v394 = vand.u32 %v393, 4294901760
        %395 = vmatpush1.msra.mxu0 %v394
        %396 = vmatprep.subr.mxu0 0.0
        %397 = vmatpush2.msra.mxu0 0.0
        %398 = vmatprep.subr.mxu0 0.0
        %399 = vmatpush2.msra.mxu0 0.0
        %400 = vmatprep.subr.mxu0 0.0
        %401 = vmatpush2.msra.mxu0 0.0
        %402 = vmatprep.subr.mxu0 0.0
        %403 = vmatpush2.msra.mxu0 0.0
        %404 = vmatprep.subr.mxu0 0.0
        %405 = vmatpush2.msra.mxu0 0.0
        %406 = vmatprep.subr.mxu0 0.0
        %407 = vmatpush2.msra.mxu0 0.0
        %408 = vmatprep.subr.mxu0 0.0
        %409 = vmatpush2.msra.mxu0 0.0
        %410 = vmatprep.subr.mxu0 0.0
        %411 = vmatpush2.msra.mxu0 0.0
        %412 = vmatprep.subr.mxu0 0.0
        %413 = vmatpush2.msra.mxu0 0.0
        %414 = vmatprep.subr.mxu0 0.0
        %415 = vmatpush2.msra.mxu0 0.0
        %416 = vmatprep.subr.mxu0 0.0
        %417 = vmatpush2.msra.mxu0 0.0
        %418 = vmatprep.subr.mxu0 0.0
        %419 = vmatpush2.msra.mxu0 0.0
        %420 = vmatprep.subr.mxu0 0.0
        %421 = vmatpush2.msra.mxu0 0.0
        %422 = vmatprep.subr.mxu0 0.0
        %423 = vmatpush2.msra.mxu0 0.0
        %424 = vmatprep.subr.mxu0 0.0
        %425 = vmatpush2.msra.mxu0 0.0
        %426 = vmatprep.subr.mxu0 0.0
        %427 = vmatpush2.msra.mxu0 0.0
        %428 = vmatprep.mubr.f32.mxu0 0.0
        %v429 = vand.u32 %v281, 4294901760
        %430 = vmatmul.mubr.f32.gmra.mxu0 %v429
        %v431 = vpop.f32.mrf.mxu0
        %v432 = vadd.f32 %v356, %v431
        %v433 = vpop.f32.mrf.mxu0
        %434 = vdwg.mxu0
        %435 = vmatprep.subr.mxu0 0.0
        %436 = vmatpush1.msra.mxu0 0.0
        %437 = vmatprep.subr.mxu0 0.0
        %438 = vmatpush1.msra.mxu0 0.0
        %439 = vmatprep.subr.mxu0 0.0
        %440 = vmatpush1.msra.mxu0 0.0
        %441 = vmatprep.subr.mxu0 0.0
        %442 = vmatpush1.msra.mxu0 0.0
        %443 = vmatprep.subr.mxu0 0.0
        %444 = vmatpush1.msra.mxu0 0.0
        %445 = vmatprep.subr.mxu0 0.0
        %446 = vmatpush1.msra.mxu0 0.0
        %447 = vmatprep.subr.mxu0 0.0
        %448 = vmatpush1.msra.mxu0 0.0
        %449 = vmatprep.subr.mxu0 0.0
        %450 = vmatpush1.msra.mxu0 0.0
        %451 = vmatprep.subr.mxu0 0.0
        %452 = vmatpush1.msra.mxu0 0.0
        %453 = vmatprep.subr.mxu0 0.0
        %454 = vmatpush1.msra.mxu0 0.0
        %455 = vmatprep.subr.mxu0 0.0
        %456 = vmatpush1.msra.mxu0 0.0
        %457 = vmatprep.subr.mxu0 0.0
        %458 = vmatpush1.msra.mxu0 0.0
        %459 = vmatprep.subr.mxu0 0.0
        %460 = vmatpush1.msra.mxu0 0.0
        %461 = vmatprep.subr.mxu0 0.0
        %462 = vmatpush1.msra.mxu0 0.0
        %463 = vmatprep.subr.mxu0 0.0
        %464 = vmatpush1.msra.mxu0 0.0
        %465 = vmatprep.subr.mxu0 0.0
        %v466 = vand.u32 %v271, 4294901760
        %v467 = vsub.f32 %v271, %v466
        %468 = vmatpush1.msra.mxu0 %v467
        %469 = vmatprep.subr.mxu0 0.0
        %470 = vmatpush2.msra.mxu0 0.0
        %471 = vmatprep.subr.mxu0 0.0
        %472 = vmatpush2.msra.mxu0 0.0
        %473 = vmatprep.subr.mxu0 0.0
        %474 = vmatpush2.msra.mxu0 0.0
        %475 = vmatprep.subr.mxu0 0.0
        %476 = vmatpush2.msra.mxu0 0.0
        %477 = vmatprep.subr.mxu0 0.0
        %478 = vmatpush2.msra.mxu0 0.0
        %479 = vmatprep.subr.mxu0 0.0
        %480 = vmatpush2.msra.mxu0 0.0
        %481 = vmatprep.subr.mxu0 0.0
        %482 = vmatpush2.msra.mxu0 0.0
        %483 = vmatprep.subr.mxu0 0.0
        %484 = vmatpush2.msra.mxu0 0.0
        %485 = vmatprep.subr.mxu0 0.0
        %486 = vmatpush2.msra.mxu0 0.0
        %487 = vmatprep.subr.mxu0 0.0
        %488 = vmatpush2.msra.mxu0 0.0
        %489 = vmatprep.subr.mxu0 0.0
        %490 = vmatpush2.msra.mxu0 0.0
        %491 = vmatprep.subr.mxu0 0.0
        %492 = vmatpush2.msra.mxu0 0.0
        %493 = vmatprep.subr.mxu0 0.0
        %494 = vmatpush2.msra.mxu0 0.0
        %495 = vmatprep.subr.mxu0 0.0
        %496 = vmatpush2.msra.mxu0 0.0
        %497 = vmatprep.subr.mxu0 0.0
        %498 = vmatpush2.msra.mxu0 0.0
        %499 = vmatprep.subr.mxu0 0.0
        %500 = vmatpush2.msra.mxu0 0.0
        %501 = vmatprep.mubr.f32.mxu0 0.0
        %v502 = vand.u32 %v281, 4294901760
        %v503 = vsub.f32 %v281, %v502
        %504 = vmatmul.mubr.f32.gmra.mxu0 %v503
        %v505 = vpop.f32.mrf.mxu0
        %v506 = vadd.f32 %v432, %v505
        %v507 = vpop.f32.mrf.mxu0
        %508 = vdwg.mxu0
        %509 = vmatprep.subr.mxu0 0.0
        %510 = vmatpush1.msra.mxu0 0.0
        %511 = vmatprep.subr.mxu0 0.0
        %512 = vmatpush1.msra.mxu0 0.0
        %513 = vmatprep.subr.mxu0 0.0
        %514 = vmatpush1.msra.mxu0 0.0
        %515 = vmatprep.subr.mxu0 0.0
        %516 = vmatpush1.msra.mxu0 0.0
        %517 = vmatprep.subr.mxu0 0.0
        %518 = vmatpush1.msra.mxu0 0.0
        %519 = vmatprep.subr.mxu0 0.0
        %520 = vmatpush1.msra.mxu0 0.0
        %521 = vmatprep.subr.mxu0 0.0
        %522 = vmatpush1.msra.mxu0 0.0
        %523 = vmatprep.subr.mxu0 0.0
        %524 = vmatpush1.msra.mxu0 0.0
        %525 = vmatprep.subr.mxu0 0.0
        %526 = vmatpush1.msra.mxu0 0.0
        %527 = vmatprep.subr.mxu0 0.0
        %528 = vmatpush1.msra.mxu0 0.0
        %529 = vmatprep.subr.mxu0 0.0
        %530 = vmatpush1.msra.mxu0 0.0
        %531 = vmatprep.subr.mxu0 0.0
        %532 = vmatpush1.msra.mxu0 0.0
        %533 = vmatprep.subr.mxu0 0.0
        %534 = vmatpush1.msra.mxu0 0.0
        %535 = vmatprep.subr.mxu0 0.0
        %536 = vmatpush1.msra.mxu0 0.0
        %537 = vmatprep.subr.mxu0 0.0
        %538 = vmatpush1.msra.mxu0 0.0
        %539 = vmatprep.subr.mxu0 0.0
        %v540 = vand.u32 %v271, 4294901760
        %541 = vmatpush1.msra.mxu0 %v540
        %542 = vmatprep.subr.mxu0 0.0
        %543 = vmatpush2.msra.mxu0 0.0
        %544 = vmatprep.subr.mxu0 0.0
        %545 = vmatpush2.msra.mxu0 0.0
        %546 = vmatprep.subr.mxu0 0.0
        %547 = vmatpush2.msra.mxu0 0.0
        %548 = vmatprep.subr.mxu0 0.0
        %549 = vmatpush2.msra.mxu0 0.0
        %550 = vmatprep.subr.mxu0 0.0
        %551 = vmatpush2.msra.mxu0 0.0
        %552 = vmatprep.subr.mxu0 0.0
        %553 = vmatpush2.msra.mxu0 0.0
        %554 = vmatprep.subr.mxu0 0.0
        %555 = vmatpush2.msra.mxu0 0.0
        %556 = vmatprep.subr.mxu0 0.0
        %557 = vmatpush2.msra.mxu0 0.0
        %558 = vmatprep.subr.mxu0 0.0
        %559 = vmatpush2.msra.mxu0 0.0
        %560 = vmatprep.subr.mxu0 0.0
        %561 = vmatpush2.msra.mxu0 0.0
        %562 = vmatprep.subr.mxu0 0.0
        %563 = vmatpush2.msra.mxu0 0.0
        %564 = vmatprep.subr.mxu0 0.0
        %565 = vmatpush2.msra.mxu0 0.0
        %566 = vmatprep.subr.mxu0 0.0
        %567 = vmatpush2.msra.mxu0 0.0
        %568 = vmatprep.subr.mxu0 0.0
        %569 = vmatpush2.msra.mxu0 0.0
        %570 = vmatprep.subr.mxu0 0.0
        %571 = vmatpush2.msra.mxu0 0.0
        %572 = vmatprep.subr.mxu0 0.0
        %573 = vmatpush2.msra.mxu0 0.0
        %574 = vmatprep.mubr.f32.mxu0 0.0
        %v575 = vand.u32 %v281, 4294901760
        %v576 = vsub.f32 %v281, %v575
        %v577 = vand.u32 %v576, 4294901760
        %578 = vmatmul.mubr.f32.gmra.mxu0 %v577
        %v579 = vpop.f32.mrf.mxu0
        %v580 = vadd.f32 %v506, %v579
        %v581 = vpop.f32.mrf.mxu0
        %582 = vdwg.mxu0
        %583 = vmatprep.subr.mxu0 0.0
        %584 = vmatpush1.msra.mxu0 0.0
        %585 = vmatprep.subr.mxu0 0.0
        %586 = vmatpush1.msra.mxu0 0.0
        %587 = vmatprep.subr.mxu0 0.0
        %588 = vmatpush1.msra.mxu0 0.0
        %589 = vmatprep.subr.mxu0 0.0
        %590 = vmatpush1.msra.mxu0 0.0
        %591 = vmatprep.subr.mxu0 0.0
        %592 = vmatpush1.msra.mxu0 0.0
        %593 = vmatprep.subr.mxu0 0.0
        %594 = vmatpush1.msra.mxu0 0.0
        %595 = vmatprep.subr.mxu0 0.0
        %596 = vmatpush1.msra.mxu0 0.0
        %597 = vmatprep.subr.mxu0 0.0
        %598 = vmatpush1.msra.mxu0 0.0
        %599 = vmatprep.subr.mxu0 0.0
        %600 = vmatpush1.msra.mxu0 0.0
        %601 = vmatprep.subr.mxu0 0.0
        %602 = vmatpush1.msra.mxu0 0.0
        %603 = vmatprep.subr.mxu0 0.0
        %604 = vmatpush1.msra.mxu0 0.0
        %605 = vmatprep.subr.mxu0 0.0
        %606 = vmatpush1.msra.mxu0 0.0
        %607 = vmatprep.subr.mxu0 0.0
        %608 = vmatpush1.msra.mxu0 0.0
        %609 = vmatprep.subr.mxu0 0.0
        %610 = vmatpush1.msra.mxu0 0.0
        %611 = vmatprep.subr.mxu0 0.0
        %612 = vmatpush1.msra.mxu0 0.0
        %613 = vmatprep.subr.mxu0 0.0
        %v614 = vand.u32 %v271, 4294901760
        %v615 = vsub.f32 %v271, %v614
        %v616 = vand.u32 %v615, 4294901760
        %617 = vmatpush1.msra.mxu0 %v616
        %618 = vmatprep.subr.mxu0 0.0
        %619 = vmatpush2.msra.mxu0 0.0
        %620 = vmatprep.subr.mxu0 0.0
        %621 = vmatpush2.msra.mxu0 0.0
        %622 = vmatprep.subr.mxu0 0.0
        %623 = vmatpush2.msra.mxu0 0.0
        %624 = vmatprep.subr.mxu0 0.0
        %625 = vmatpush2.msra.mxu0 0.0
        %626 = vmatprep.subr.mxu0 0.0
        %627 = vmatpush2.msra.mxu0 0.0
        %628 = vmatprep.subr.mxu0 0.0
        %629 = vmatpush2.msra.mxu0 0.0
        %630 = vmatprep.subr.mxu0 0.0
        %631 = vmatpush2.msra.mxu0 0.0
        %632 = vmatprep.subr.mxu0 0.0
        %633 = vmatpush2.msra.mxu0 0.0
        %634 = vmatprep.subr.mxu0 0.0
        %635 = vmatpush2.msra.mxu0 0.0
        %636 = vmatprep.subr.mxu0 0.0
        %637 = vmatpush2.msra.mxu0 0.0
        %638 = vmatprep.subr.mxu0 0.0
        %639 = vmatpush2.msra.mxu0 0.0
        %640 = vmatprep.subr.mxu0 0.0
        %641 = vmatpush2.msra.mxu0 0.0
        %642 = vmatprep.subr.mxu0 0.0
        %643 = vmatpush2.msra.mxu0 0.0
        %644 = vmatprep.subr.mxu0 0.0
        %645 = vmatpush2.msra.mxu0 0.0
        %646 = vmatprep.subr.mxu0 0.0
        %647 = vmatpush2.msra.mxu0 0.0
        %648 = vmatprep.subr.mxu0 0.0
        %649 = vmatpush2.msra.mxu0 0.0
        %650 = vmatprep.mubr.f32.mxu0 0.0
        %v651 = vand.u32 %v281, 4294901760
        %652 = vmatmul.mubr.f32.gmra.mxu0 %v651
        %v653 = vpop.f32.mrf.mxu0
        %v654 = vadd.f32 %v580, %v653
        %v655 = vpop.f32.mrf.mxu0
        %656 = vdwg.mxu0
        %657 = vmatprep.subr.mxu0 0.0
        %658 = vmatpush1.msra.mxu0 0.0
        %659 = vmatprep.subr.mxu0 0.0
        %660 = vmatpush1.msra.mxu0 0.0
        %661 = vmatprep.subr.mxu0 0.0
        %662 = vmatpush1.msra.mxu0 0.0
        %663 = vmatprep.subr.mxu0 0.0
        %664 = vmatpush1.msra.mxu0 0.0
        %665 = vmatprep.subr.mxu0 0.0
        %666 = vmatpush1.msra.mxu0 0.0
        %667 = vmatprep.subr.mxu0 0.0
        %668 = vmatpush1.msra.mxu0 0.0
        %669 = vmatprep.subr.mxu0 0.0
        %670 = vmatpush1.msra.mxu0 0.0
        %671 = vmatprep.subr.mxu0 0.0
        %672 = vmatpush1.msra.mxu0 0.0
        %673 = vmatprep.subr.mxu0 0.0
        %674 = vmatpush1.msra.mxu0 0.0
        %675 = vmatprep.subr.mxu0 0.0
        %676 = vmatpush1.msra.mxu0 0.0
        %677 = vmatprep.subr.mxu0 0.0
        %678 = vmatpush1.msra.mxu0 0.0
        %679 = vmatprep.subr.mxu0 0.0
        %680 = vmatpush1.msra.mxu0 0.0
        %681 = vmatprep.subr.mxu0 0.0
        %682 = vmatpush1.msra.mxu0 0.0
        %683 = vmatprep.subr.mxu0 0.0
        %684 = vmatpush1.msra.mxu0 0.0
        %685 = vmatprep.subr.mxu0 0.0
        %686 = vmatpush1.msra.mxu0 0.0
        %687 = vmatprep.subr.mxu0 0.0
        %v688 = vand.u32 %v271, 4294901760
        %689 = vmatpush1.msra.mxu0 %v688
        %690 = vmatprep.subr.mxu0 0.0
        %691 = vmatpush2.msra.mxu0 0.0
        %692 = vmatprep.subr.mxu0 0.0
        %693 = vmatpush2.msra.mxu0 0.0
        %694 = vmatprep.subr.mxu0 0.0
        %695 = vmatpush2.msra.mxu0 0.0
        %696 = vmatprep.subr.mxu0 0.0
        %697 = vmatpush2.msra.mxu0 0.0
        %698 = vmatprep.subr.mxu0 0.0
        %699 = vmatpush2.msra.mxu0 0.0
        %700 = vmatprep.subr.mxu0 0.0
        %701 = vmatpush2.msra.mxu0 0.0
        %702 = vmatprep.subr.mxu0 0.0
        %703 = vmatpush2.msra.mxu0 0.0
        %704 = vmatprep.subr.mxu0 0.0
        %705 = vmatpush2.msra.mxu0 0.0
        %706 = vmatprep.subr.mxu0 0.0
        %707 = vmatpush2.msra.mxu0 0.0
        %708 = vmatprep.subr.mxu0 0.0
        %709 = vmatpush2.msra.mxu0 0.0
        %710 = vmatprep.subr.mxu0 0.0
        %711 = vmatpush2.msra.mxu0 0.0
        %712 = vmatprep.subr.mxu0 0.0
        %713 = vmatpush2.msra.mxu0 0.0
        %714 = vmatprep.subr.mxu0 0.0
        %715 = vmatpush2.msra.mxu0 0.0
        %716 = vmatprep.subr.mxu0 0.0
        %717 = vmatpush2.msra.mxu0 0.0
        %718 = vmatprep.subr.mxu0 0.0
        %719 = vmatpush2.msra.mxu0 0.0
        %720 = vmatprep.subr.mxu0 0.0
        %721 = vmatpush2.msra.mxu0 0.0
        %722 = vmatprep.mubr.f32.mxu0 0.0
        %v723 = vand.u32 %v281, 4294901760
        %724 = vmatmul.mubr.f32.gmra.mxu0 %v723
        %v725 = vpop.f32.mrf.mxu0
        %v726 = vadd.f32 %v654, %v725
        %v727 = vpop.f32.mrf.mxu0
        %728 = vdwg.mxu0
        %v729 = vld [vmem:[%s4] sm:$0xff]
        %v730 = vld [vmem:[%s4 + $0x8] sm:$0xff]
        %vm731 = vcmask 130048
        %v733 = vsel %vm731, %v726, 0
        %735 = vmatprep.subr.mxu0 0.0
        %736 = vmatpush1.msra.mxu0 0.0
        %737 = vmatprep.subr.mxu0 0.0
        %738 = vmatpush1.msra.mxu0 0.0
        %739 = vmatprep.subr.mxu0 0.0
        %740 = vmatpush1.msra.mxu0 0.0
        %741 = vmatprep.subr.mxu0 0.0
        %742 = vmatpush1.msra.mxu0 0.0
        %743 = vmatprep.subr.mxu0 0.0
        %744 = vmatpush1.msra.mxu0 0.0
        %745 = vmatprep.subr.mxu0 0.0
        %746 = vmatpush1.msra.mxu0 0.0
        %747 = vmatprep.subr.mxu0 0.0
        %748 = vmatpush1.msra.mxu0 0.0
        %749 = vmatprep.subr.mxu0 0.0
        %750 = vmatpush1.msra.mxu0 0.0
        %751 = vmatprep.subr.mxu0 0.0
        %752 = vmatpush1.msra.mxu0 0.0
        %753 = vmatprep.subr.mxu0 0.0
        %754 = vmatpush1.msra.mxu0 0.0
        %755 = vmatprep.subr.mxu0 0.0
        %756 = vmatpush1.msra.mxu0 0.0
        %757 = vmatprep.subr.mxu0 0.0
        %758 = vmatpush1.msra.mxu0 0.0
        %759 = vmatprep.subr.mxu0 0.0
        %760 = vmatpush1.msra.mxu0 0.0
        %761 = vmatprep.subr.mxu0 0.0
        %762 = vmatpush1.msra.mxu0 0.0
        %763 = vmatprep.subr.mxu0 0.0
        %v764 = vand.u32 %v730, 4294901760
        %765 = vmatpush1.msra.mxu0 %v764
        %766 = vmatprep.subr.mxu0 0.0
        %v767 = vand.u32 %v729, 4294901760
        %768 = vmatpush1.msra.mxu0 %v767
        %769 = vmatprep.subr.mxu0 0.0
        %770 = vmatpush2.msra.mxu0 0.0
        %771 = vmatprep.subr.mxu0 0.0
        %772 = vmatpush2.msra.mxu0 0.0
        %773 = vmatprep.subr.mxu0 0.0
        %774 = vmatpush2.msra.mxu0 0.0
        %775 = vmatprep.subr.mxu0 0.0
        %776 = vmatpush2.msra.mxu0 0.0
        %777 = vmatprep.subr.mxu0 0.0
        %778 = vmatpush2.msra.mxu0 0.0
        %779 = vmatprep.subr.mxu0 0.0
        %780 = vmatpush2.msra.mxu0 0.0
        %781 = vmatprep.subr.mxu0 0.0
        %782 = vmatpush2.msra.mxu0 0.0
        %783 = vmatprep.subr.mxu0 0.0
        %784 = vmatpush2.msra.mxu0 0.0
        %785 = vmatprep.subr.mxu0 0.0
        %786 = vmatpush2.msra.mxu0 0.0
        %787 = vmatprep.subr.mxu0 0.0
        %788 = vmatpush2.msra.mxu0 0.0
        %789 = vmatprep.subr.mxu0 0.0
        %790 = vmatpush2.msra.mxu0 0.0
        %791 = vmatprep.subr.mxu0 0.0
        %792 = vmatpush2.msra.mxu0 0.0
        %793 = vmatprep.subr.mxu0 0.0
        %794 = vmatpush2.msra.mxu0 0.0
        %795 = vmatprep.subr.mxu0 0.0
        %796 = vmatpush2.msra.mxu0 0.0
        %797 = vmatprep.subr.mxu0 0.0
        %798 = vmatpush2.msra.mxu0 0.0
        %799 = vmatprep.subr.mxu0 0.0
        %800 = vmatpush2.msra.mxu0 0.0
        %801 = vmatprep.mubr.f32.mxu0 0.0
        %v802 = vand.u32 %v733, 4294901760
        %v803 = vsub.f32 %v733, %v802
        %v804 = vand.u32 %v803, 4294901760
        %v805 = vsub.f32 %v803, %v804
        %v806 = vand.u32 %v805, 4294901760
        %807 = vmatmul.mubr.f32.gmra.mxu0 %v806
        %v808 = vpop.f32.mrf.mxu0
        %v809 = vadd.f32 0.0, %v808
        %v810 = vpop.f32.mrf.mxu0
        %811 = vdwg.mxu0
        %812 = vmatprep.subr.mxu0 0.0
        %813 = vmatpush1.msra.mxu0 0.0
        %814 = vmatprep.subr.mxu0 0.0
        %815 = vmatpush1.msra.mxu0 0.0
        %816 = vmatprep.subr.mxu0 0.0
        %817 = vmatpush1.msra.mxu0 0.0
        %818 = vmatprep.subr.mxu0 0.0
        %819 = vmatpush1.msra.mxu0 0.0
        %820 = vmatprep.subr.mxu0 0.0
        %821 = vmatpush1.msra.mxu0 0.0
        %822 = vmatprep.subr.mxu0 0.0
        %823 = vmatpush1.msra.mxu0 0.0
        %824 = vmatprep.subr.mxu0 0.0
        %825 = vmatpush1.msra.mxu0 0.0
        %826 = vmatprep.subr.mxu0 0.0
        %827 = vmatpush1.msra.mxu0 0.0
        %828 = vmatprep.subr.mxu0 0.0
        %829 = vmatpush1.msra.mxu0 0.0
        %830 = vmatprep.subr.mxu0 0.0
        %831 = vmatpush1.msra.mxu0 0.0
        %832 = vmatprep.subr.mxu0 0.0
        %833 = vmatpush1.msra.mxu0 0.0
        %834 = vmatprep.subr.mxu0 0.0
        %835 = vmatpush1.msra.mxu0 0.0
        %836 = vmatprep.subr.mxu0 0.0
        %837 = vmatpush1.msra.mxu0 0.0
        %838 = vmatprep.subr.mxu0 0.0
        %839 = vmatpush1.msra.mxu0 0.0
        %840 = vmatprep.subr.mxu0 0.0
        %v841 = vand.u32 %v730, 4294901760
        %v842 = vsub.f32 %v730, %v841
        %v843 = vand.u32 %v842, 4294901760
        %v844 = vsub.f32 %v842, %v843
        %v845 = vand.u32 %v844, 4294901760
        %846 = vmatpush1.msra.mxu0 %v845
        %847 = vmatprep.subr.mxu0 0.0
        %v848 = vand.u32 %v729, 4294901760
        %v849 = vsub.f32 %v729, %v848
        %v850 = vand.u32 %v849, 4294901760
        %v851 = vsub.f32 %v849, %v850
        %v852 = vand.u32 %v851, 4294901760
        %853 = vmatpush1.msra.mxu0 %v852
        %854 = vmatprep.subr.mxu0 0.0
        %855 = vmatpush2.msra.mxu0 0.0
        %856 = vmatprep.subr.mxu0 0.0
        %857 = vmatpush2.msra.mxu0 0.0
        %858 = vmatprep.subr.mxu0 0.0
        %859 = vmatpush2.msra.mxu0 0.0
        %860 = vmatprep.subr.mxu0 0.0
        %861 = vmatpush2.msra.mxu0 0.0
        %862 = vmatprep.subr.mxu0 0.0
        %863 = vmatpush2.msra.mxu0 0.0
        %864 = vmatprep.subr.mxu0 0.0
        %865 = vmatpush2.msra.mxu0 0.0
        %866 = vmatprep.subr.mxu0 0.0
        %867 = vmatpush2.msra.mxu0 0.0
        %868 = vmatprep.subr.mxu0 0.0
        %869 = vmatpush2.msra.mxu0 0.0
        %870 = vmatprep.subr.mxu0 0.0
        %871 = vmatpush2.msra.mxu0 0.0
        %872 = vmatprep.subr.mxu0 0.0
        %873 = vmatpush2.msra.mxu0 0.0
        %874 = vmatprep.subr.mxu0 0.0
        %875 = vmatpush2.msra.mxu0 0.0
        %876 = vmatprep.subr.mxu0 0.0
        %877 = vmatpush2.msra.mxu0 0.0
        %878 = vmatprep.subr.mxu0 0.0
        %879 = vmatpush2.msra.mxu0 0.0
        %880 = vmatprep.subr.mxu0 0.0
        %881 = vmatpush2.msra.mxu0 0.0
        %882 = vmatprep.subr.mxu0 0.0
        %883 = vmatpush2.msra.mxu0 0.0
        %884 = vmatprep.subr.mxu0 0.0
        %885 = vmatpush2.msra.mxu0 0.0
        %886 = vmatprep.mubr.f32.mxu0 0.0
        %v887 = vand.u32 %v733, 4294901760
        %888 = vmatmul.mubr.f32.gmra.mxu0 %v887
        %v889 = vpop.f32.mrf.mxu0
        %v890 = vadd.f32 %v809, %v889
        %v891 = vpop.f32.mrf.mxu0
        %892 = vdwg.mxu0
        %893 = vmatprep.subr.mxu0 0.0
        %894 = vmatpush1.msra.mxu0 0.0
        %895 = vmatprep.subr.mxu0 0.0
        %896 = vmatpush1.msra.mxu0 0.0
        %897 = vmatprep.subr.mxu0 0.0
        %898 = vmatpush1.msra.mxu0 0.0
        %899 = vmatprep.subr.mxu0 0.0
        %900 = vmatpush1.msra.mxu0 0.0
        %901 = vmatprep.subr.mxu0 0.0
        %902 = vmatpush1.msra.mxu0 0.0
        %903 = vmatprep.subr.mxu0 0.0
        %904 = vmatpush1.msra.mxu0 0.0
        %905 = vmatprep.subr.mxu0 0.0
        %906 = vmatpush1.msra.mxu0 0.0
        %907 = vmatprep.subr.mxu0 0.0
        %908 = vmatpush1.msra.mxu0 0.0
        %909 = vmatprep.subr.mxu0 0.0
        %910 = vmatpush1.msra.mxu0 0.0
        %911 = vmatprep.subr.mxu0 0.0
        %912 = vmatpush1.msra.mxu0 0.0
        %913 = vmatprep.subr.mxu0 0.0
        %914 = vmatpush1.msra.mxu0 0.0
        %915 = vmatprep.subr.mxu0 0.0
        %916 = vmatpush1.msra.mxu0 0.0
        %917 = vmatprep.subr.mxu0 0.0
        %918 = vmatpush1.msra.mxu0 0.0
        %919 = vmatprep.subr.mxu0 0.0
        %920 = vmatpush1.msra.mxu0 0.0
        %921 = vmatprep.subr.mxu0 0.0
        %v922 = vand.u32 %v730, 4294901760
        %v923 = vsub.f32 %v730, %v922
        %924 = vmatpush1.msra.mxu0 %v923
        %925 = vmatprep.subr.mxu0 0.0
        %v926 = vand.u32 %v729, 4294901760
        %v927 = vsub.f32 %v729, %v926
        %928 = vmatpush1.msra.mxu0 %v927
        %929 = vmatprep.subr.mxu0 0.0
        %930 = vmatpush2.msra.mxu0 0.0
        %931 = vmatprep.subr.mxu0 0.0
        %932 = vmatpush2.msra.mxu0 0.0
        %933 = vmatprep.subr.mxu0 0.0
        %934 = vmatpush2.msra.mxu0 0.0
        %935 = vmatprep.subr.mxu0 0.0
        %936 = vmatpush2.msra.mxu0 0.0
        %937 = vmatprep.subr.mxu0 0.0
        %938 = vmatpush2.msra.mxu0 0.0
        %939 = vmatprep.subr.mxu0 0.0
        %940 = vmatpush2.msra.mxu0 0.0
        %941 = vmatprep.subr.mxu0 0.0
        %942 = vmatpush2.msra.mxu0 0.0
        %943 = vmatprep.subr.mxu0 0.0
        %944 = vmatpush2.msra.mxu0 0.0
        %945 = vmatprep.subr.mxu0 0.0
        %946 = vmatpush2.msra.mxu0 0.0
        %947 = vmatprep.subr.mxu0 0.0
        %948 = vmatpush2.msra.mxu0 0.0
        %949 = vmatprep.subr.mxu0 0.0
        %950 = vmatpush2.msra.mxu0 0.0
        %951 = vmatprep.subr.mxu0 0.0
        %952 = vmatpush2.msra.mxu0 0.0
        %953 = vmatprep.subr.mxu0 0.0
        %954 = vmatpush2.msra.mxu0 0.0
        %955 = vmatprep.subr.mxu0 0.0
        %956 = vmatpush2.msra.mxu0 0.0
        %957 = vmatprep.subr.mxu0 0.0
        %958 = vmatpush2.msra.mxu0 0.0
        %959 = vmatprep.subr.mxu0 0.0
        %960 = vmatpush2.msra.mxu0 0.0
        %961 = vmatprep.mubr.f32.mxu0 0.0
        %v962 = vand.u32 %v733, 4294901760
        %v963 = vsub.f32 %v733, %v962
        %964 = vmatmul.mubr.f32.gmra.mxu0 %v963
        %v965 = vpop.f32.mrf.mxu0
        %v966 = vadd.f32 %v890, %v965
        %v967 = vpop.f32.mrf.mxu0
        %968 = vdwg.mxu0
        %969 = vmatprep.subr.mxu0 0.0
        %970 = vmatpush1.msra.mxu0 0.0
        %971 = vmatprep.subr.mxu0 0.0
        %972 = vmatpush1.msra.mxu0 0.0
        %973 = vmatprep.subr.mxu0 0.0
        %974 = vmatpush1.msra.mxu0 0.0
        %975 = vmatprep.subr.mxu0 0.0
        %976 = vmatpush1.msra.mxu0 0.0
        %977 = vmatprep.subr.mxu0 0.0
        %978 = vmatpush1.msra.mxu0 0.0
        %979 = vmatprep.subr.mxu0 0.0
        %980 = vmatpush1.msra.mxu0 0.0
        %981 = vmatprep.subr.mxu0 0.0
        %982 = vmatpush1.msra.mxu0 0.0
        %983 = vmatprep.subr.mxu0 0.0
        %984 = vmatpush1.msra.mxu0 0.0
        %985 = vmatprep.subr.mxu0 0.0
        %986 = vmatpush1.msra.mxu0 0.0
        %987 = vmatprep.subr.mxu0 0.0
        %988 = vmatpush1.msra.mxu0 0.0
        %989 = vmatprep.subr.mxu0 0.0
        %990 = vmatpush1.msra.mxu0 0.0
        %991 = vmatprep.subr.mxu0 0.0
        %992 = vmatpush1.msra.mxu0 0.0
        %993 = vmatprep.subr.mxu0 0.0
        %994 = vmatpush1.msra.mxu0 0.0
        %995 = vmatprep.subr.mxu0 0.0
        %996 = vmatpush1.msra.mxu0 0.0
        %997 = vmatprep.subr.mxu0 0.0
        %v998 = vand.u32 %v730, 4294901760
        %999 = vmatpush1.msra.mxu0 %v998
        %1000 = vmatprep.subr.mxu0 0.0
        %v1001 = vand.u32 %v729, 4294901760
        %1002 = vmatpush1.msra.mxu0 %v1001
        %1003 = vmatprep.subr.mxu0 0.0
        %1004 = vmatpush2.msra.mxu0 0.0
        %1005 = vmatprep.subr.mxu0 0.0
        %1006 = vmatpush2.msra.mxu0 0.0
        %1007 = vmatprep.subr.mxu0 0.0
        %1008 = vmatpush2.msra.mxu0 0.0
        %1009 = vmatprep.subr.mxu0 0.0
        %1010 = vmatpush2.msra.mxu0 0.0
        %1011 = vmatprep.subr.mxu0 0.0
        %1012 = vmatpush2.msra.mxu0 0.0
        %1013 = vmatprep.subr.mxu0 0.0
        %1014 = vmatpush2.msra.mxu0 0.0
        %1015 = vmatprep.subr.mxu0 0.0
        %1016 = vmatpush2.msra.mxu0 0.0
        %1017 = vmatprep.subr.mxu0 0.0
        %1018 = vmatpush2.msra.mxu0 0.0
        %1019 = vmatprep.subr.mxu0 0.0
        %1020 = vmatpush2.msra.mxu0 0.0
        %1021 = vmatprep.subr.mxu0 0.0
        %1022 = vmatpush2.msra.mxu0 0.0
        %1023 = vmatprep.subr.mxu0 0.0
        %1024 = vmatpush2.msra.mxu0 0.0
        %1025 = vmatprep.subr.mxu0 0.0
        %1026 = vmatpush2.msra.mxu0 0.0
        %1027 = vmatprep.subr.mxu0 0.0
        %1028 = vmatpush2.msra.mxu0 0.0
        %1029 = vmatprep.subr.mxu0 0.0
        %1030 = vmatpush2.msra.mxu0 0.0
        %1031 = vmatprep.subr.mxu0 0.0
        %1032 = vmatpush2.msra.mxu0 0.0
        %1033 = vmatprep.subr.mxu0 0.0
        %1034 = vmatpush2.msra.mxu0 0.0
        %1035 = vmatprep.mubr.f32.mxu0 0.0
        %v1036 = vand.u32 %v733, 4294901760
        %v1037 = vsub.f32 %v733, %v1036
        %v1038 = vand.u32 %v1037, 4294901760
        %1039 = vmatmul.mubr.f32.gmra.mxu0 %v1038
        %v1040 = vpop.f32.mrf.mxu0
        %v1041 = vadd.f32 %v966, %v1040
        %v1042 = vpop.f32.mrf.mxu0
        %1043 = vdwg.mxu0
        %1044 = vmatprep.subr.mxu0 0.0
        %1045 = vmatpush1.msra.mxu0 0.0
        %1046 = vmatprep.subr.mxu0 0.0
        %1047 = vmatpush1.msra.mxu0 0.0
        %1048 = vmatprep.subr.mxu0 0.0
        %1049 = vmatpush1.msra.mxu0 0.0
        %1050 = vmatprep.subr.mxu0 0.0
        %1051 = vmatpush1.msra.mxu0 0.0
        %1052 = vmatprep.subr.mxu0 0.0
        %1053 = vmatpush1.msra.mxu0 0.0
        %1054 = vmatprep.subr.mxu0 0.0
        %1055 = vmatpush1.msra.mxu0 0.0
        %1056 = vmatprep.subr.mxu0 0.0
        %1057 = vmatpush1.msra.mxu0 0.0
        %1058 = vmatprep.subr.mxu0 0.0
        %1059 = vmatpush1.msra.mxu0 0.0
        %1060 = vmatprep.subr.mxu0 0.0
        %1061 = vmatpush1.msra.mxu0 0.0
        %1062 = vmatprep.subr.mxu0 0.0
        %1063 = vmatpush1.msra.mxu0 0.0
        %1064 = vmatprep.subr.mxu0 0.0
        %1065 = vmatpush1.msra.mxu0 0.0
        %1066 = vmatprep.subr.mxu0 0.0
        %1067 = vmatpush1.msra.mxu0 0.0
        %1068 = vmatprep.subr.mxu0 0.0
        %1069 = vmatpush1.msra.mxu0 0.0
        %1070 = vmatprep.subr.mxu0 0.0
        %1071 = vmatpush1.msra.mxu0 0.0
        %1072 = vmatprep.subr.mxu0 0.0
        %v1073 = vand.u32 %v730, 4294901760
        %v1074 = vsub.f32 %v730, %v1073
        %v1075 = vand.u32 %v1074, 4294901760
        %1076 = vmatpush1.msra.mxu0 %v1075
        %1077 = vmatprep.subr.mxu0 0.0
        %v1078 = vand.u32 %v729, 4294901760
        %v1079 = vsub.f32 %v729, %v1078
        %v1080 = vand.u32 %v1079, 4294901760
        %1081 = vmatpush1.msra.mxu0 %v1080
        %1082 = vmatprep.subr.mxu0 0.0
        %1083 = vmatpush2.msra.mxu0 0.0
        %1084 = vmatprep.subr.mxu0 0.0
        %1085 = vmatpush2.msra.mxu0 0.0
        %1086 = vmatprep.subr.mxu0 0.0
        %1087 = vmatpush2.msra.mxu0 0.0
        %1088 = vmatprep.subr.mxu0 0.0
        %1089 = vmatpush2.msra.mxu0 0.0
        %1090 = vmatprep.subr.mxu0 0.0
        %1091 = vmatpush2.msra.mxu0 0.0
        %1092 = vmatprep.subr.mxu0 0.0
        %1093 = vmatpush2.msra.mxu0 0.0
        %1094 = vmatprep.subr.mxu0 0.0
        %1095 = vmatpush2.msra.mxu0 0.0
        %1096 = vmatprep.subr.mxu0 0.0
        %1097 = vmatpush2.msra.mxu0 0.0
        %1098 = vmatprep.subr.mxu0 0.0
        %1099 = vmatpush2.msra.mxu0 0.0
        %1100 = vmatprep.subr.mxu0 0.0
        %1101 = vmatpush2.msra.mxu0 0.0
        %1102 = vmatprep.subr.mxu0 0.0
        %1103 = vmatpush2.msra.mxu0 0.0
        %1104 = vmatprep.subr.mxu0 0.0
        %1105 = vmatpush2.msra.mxu0 0.0
        %1106 = vmatprep.subr.mxu0 0.0
        %1107 = vmatpush2.msra.mxu0 0.0
        %1108 = vmatprep.subr.mxu0 0.0
        %1109 = vmatpush2.msra.mxu0 0.0
        %1110 = vmatprep.subr.mxu0 0.0
        %1111 = vmatpush2.msra.mxu0 0.0
        %1112 = vmatprep.subr.mxu0 0.0
        %1113 = vmatpush2.msra.mxu0 0.0
        %1114 = vmatprep.mubr.f32.mxu0 0.0
        %v1115 = vand.u32 %v733, 4294901760
        %1116 = vmatmul.mubr.f32.gmra.mxu0 %v1115
        %v1117 = vpop.f32.mrf.mxu0
        %v1118 = vadd.f32 %v1041, %v1117
        %v1119 = vpop.f32.mrf.mxu0
        %1120 = vdwg.mxu0
        %1121 = vmatprep.subr.mxu0 0.0
        %1122 = vmatpush1.msra.mxu0 0.0
        %1123 = vmatprep.subr.mxu0 0.0
        %1124 = vmatpush1.msra.mxu0 0.0
        %1125 = vmatprep.subr.mxu0 0.0
        %1126 = vmatpush1.msra.mxu0 0.0
        %1127 = vmatprep.subr.mxu0 0.0
        %1128 = vmatpush1.msra.mxu0 0.0
        %1129 = vmatprep.subr.mxu0 0.0
        %1130 = vmatpush1.msra.mxu0 0.0
        %1131 = vmatprep.subr.mxu0 0.0
        %1132 = vmatpush1.msra.mxu0 0.0
        %1133 = vmatprep.subr.mxu0 0.0
        %1134 = vmatpush1.msra.mxu0 0.0
        %1135 = vmatprep.subr.mxu0 0.0
        %1136 = vmatpush1.msra.mxu0 0.0
        %1137 = vmatprep.subr.mxu0 0.0
        %1138 = vmatpush1.msra.mxu0 0.0
        %1139 = vmatprep.subr.mxu0 0.0
        %1140 = vmatpush1.msra.mxu0 0.0
        %1141 = vmatprep.subr.mxu0 0.0
        %1142 = vmatpush1.msra.mxu0 0.0
        %1143 = vmatprep.subr.mxu0 0.0
        %1144 = vmatpush1.msra.mxu0 0.0
        %1145 = vmatprep.subr.mxu0 0.0
        %1146 = vmatpush1.msra.mxu0 0.0
        %1147 = vmatprep.subr.mxu0 0.0
        %1148 = vmatpush1.msra.mxu0 0.0
        %1149 = vmatprep.subr.mxu0 0.0
        %v1150 = vand.u32 %v730, 4294901760
        %1151 = vmatpush1.msra.mxu0 %v1150
        %1152 = vmatprep.subr.mxu0 0.0
        %v1153 = vand.u32 %v729, 4294901760
        %1154 = vmatpush1.msra.mxu0 %v1153
        %1155 = vmatprep.subr.mxu0 0.0
        %1156 = vmatpush2.msra.mxu0 0.0
        %1157 = vmatprep.subr.mxu0 0.0
        %1158 = vmatpush2.msra.mxu0 0.0
        %1159 = vmatprep.subr.mxu0 0.0
        %1160 = vmatpush2.msra.mxu0 0.0
        %1161 = vmatprep.subr.mxu0 0.0
        %1162 = vmatpush2.msra.mxu0 0.0
        %1163 = vmatprep.subr.mxu0 0.0
        %1164 = vmatpush2.msra.mxu0 0.0
        %1165 = vmatprep.subr.mxu0 0.0
        %1166 = vmatpush2.msra.mxu0 0.0
        %1167 = vmatprep.subr.mxu0 0.0
        %1168 = vmatpush2.msra.mxu0 0.0
        %1169 = vmatprep.subr.mxu0 0.0
        %1170 = vmatpush2.msra.mxu0 0.0
        %1171 = vmatprep.subr.mxu0 0.0
        %1172 = vmatpush2.msra.mxu0 0.0
        %1173 = vmatprep.subr.mxu0 0.0
        %1174 = vmatpush2.msra.mxu0 0.0
        %1175 = vmatprep.subr.mxu0 0.0
        %1176 = vmatpush2.msra.mxu0 0.0
        %1177 = vmatprep.subr.mxu0 0.0
        %1178 = vmatpush2.msra.mxu0 0.0
        %1179 = vmatprep.subr.mxu0 0.0
        %1180 = vmatpush2.msra.mxu0 0.0
        %1181 = vmatprep.subr.mxu0 0.0
        %1182 = vmatpush2.msra.mxu0 0.0
        %1183 = vmatprep.subr.mxu0 0.0
        %1184 = vmatpush2.msra.mxu0 0.0
        %1185 = vmatprep.subr.mxu0 0.0
        %1186 = vmatpush2.msra.mxu0 0.0
        %1187 = vmatprep.mubr.f32.mxu0 0.0
        %v1188 = vand.u32 %v733, 4294901760
        %1189 = vmatmul.mubr.f32.gmra.mxu0 %v1188
        %v1190 = vpop.f32.mrf.mxu0
        %v1191 = vadd.f32 %v1118, %v1190
        %v1192 = vpop.f32.mrf.mxu0
        %1193 = vdwg.mxu0
        %1195 = vset.pattern.permute.xlu0 0
        %1196 = vperm.xlu0 %1195, %v1191
        %v1197 = vpop.permute.xlu0 %1196
        %1199 = vset.pattern.permute.xlu0 1
        %1200 = vperm.xlu0 %1199, %v1191
        %v1201 = vpop.permute.xlu0 %1200
        %v1203 = vlaneseq
        %v1204 = vshrl.u32 %v1203, 7
        %v1205 = vlaneseq
        %v1206 = vand.u32 %v1205, 127
        %vm1207 = vcmp.eq.s32.totalorder %v1204, %v1206
        %v1208 = vsel %vm1207, 1, 0
        %v1209 = vcvt.s32.f32 %v1208
        %v1210 = vmul.f32 %v1201, %v1209
        %v1211 = vsel %vm279, %v1210, 0.0
        %v1212 = vrot.slane %v1211, 4
        %v1213 = vadd.f32 %v1211, %v1212
        %v1214 = vrot.slane %v1213, 2
        %v1215 = vadd.f32 %v1213, %v1214
        %v1216 = vrot.slane %v1215, 1
        %v1217 = vadd.f32 %v1215, %v1216
        %v1218 = vadd.f32 %v1197, %v1217
        %vm1219 = vcmp.gt.f32.partialorder %v1218, 0.0
        %v1220 = vmul.f32 %v1218, 0.2
        %v1221 = vsel %vm1219, %v1218, %v1220
        %v1222 = vld [vmem:[%s231] sm:$0x3]
        %v1223 = vunpack.c.0.s8 %v1222
        %v1224 = vcvt.s32.f32 %v1223
        %vm1225 = vcmp.eq.f32.partialorder %v1224, 0.0
        %v1226 = vsel %vm1225, -inf, %v1221
        %v1227 = vsel %vm279, %v1226, -inf
        %1228 = vmax.xlane.f32.xlu0 %v1227
        %v1229 = vpop.xlane.xlu0 %1228
        %v1230 = vsub.f32 %v1226, %v1229
        %v1231 = vmul.f32 %v1230, 1.442695
        %v1232 = vpow.pop %v1231
        %v1233 = vsel %vm279, %v1232, 0.0
        %1234 = vadd.xlane.f32.xlu0 %v1233
        %v1235 = vpop.xlane.xlu0 %1234
        %v1236 = vrcp.pop %v1235
        %vm1237 = vcmp.ge.s32.totalorder %v1206, 0
        %vm1238 = vcmp.lt.s32.totalorder %v1206, 16
        %vm1239 = vmand %vm1237, %vm1238
        %v1240 = vsel %vm1239, 1, 0
        %vm1241 = vcmp.eq.s32.totalorder %v1240, 1
        %v1242 = vsel %vm1241, %v726, 0.0
        %v1244 = vsel %vm279, %v1232, 0
        %1246 = vmatprep.subr.mxu0 0.0
        %1247 = vmatpush1.msra.mxu0 0.0
        %1248 = vmatprep.subr.mxu0 0.0
        %1249 = vmatpush1.msra.mxu0 0.0
        %1250 = vmatprep.subr.mxu0 0.0
        %1251 = vmatpush1.msra.mxu0 0.0
        %1252 = vmatprep.subr.mxu0 0.0
        %1253 = vmatpush1.msra.mxu0 0.0
        %1254 = vmatprep.subr.mxu0 0.0
        %1255 = vmatpush1.msra.mxu0 0.0
        %1256 = vmatprep.subr.mxu0 0.0
        %1257 = vmatpush1.msra.mxu0 0.0
        %1258 = vmatprep.subr.mxu0 0.0
        %1259 = vmatpush1.msra.mxu0 0.0
        %1260 = vmatprep.subr.mxu0 0.0
        %1261 = vmatpush1.msra.mxu0 0.0
        %1262 = vmatprep.subr.mxu0 0.0
        %1263 = vmatpush1.msra.mxu0 0.0
        %1264 = vmatprep.subr.mxu0 0.0
        %1265 = vmatpush1.msra.mxu0 0.0
        %1266 = vmatprep.subr.mxu0 0.0
        %1267 = vmatpush1.msra.mxu0 0.0
        %1268 = vmatprep.subr.mxu0 0.0
        %1269 = vmatpush1.msra.mxu0 0.0
        %1270 = vmatprep.subr.mxu0 0.0
        %1271 = vmatpush1.msra.mxu0 0.0
        %1272 = vmatprep.subr.mxu0 0.0
        %1273 = vmatpush1.msra.mxu0 0.0
        %1274 = vmatprep.subr.mxu0 0.0
        %1275 = vmatpush1.msra.mxu0 0.0
        %1276 = vmatprep.subr.mxu0 0.0
        %v1277 = vand.u32 %v1242, 4294901760
        %1278 = vmatpush1.msra.mxu0 %v1277
        %1279 = vmatprep.subr.mxu0 0.0
        %1280 = vmatpush2.msra.mxu0 0.0
        %1281 = vmatprep.subr.mxu0 0.0
        %1282 = vmatpush2.msra.mxu0 0.0
        %1283 = vmatprep.subr.mxu0 0.0
        %1284 = vmatpush2.msra.mxu0 0.0
        %1285 = vmatprep.subr.mxu0 0.0
        %1286 = vmatpush2.msra.mxu0 0.0
        %1287 = vmatprep.subr.mxu0 0.0
        %1288 = vmatpush2.msra.mxu0 0.0
        %1289 = vmatprep.subr.mxu0 0.0
        %1290 = vmatpush2.msra.mxu0 0.0
        %1291 = vmatprep.subr.mxu0 0.0
        %1292 = vmatpush2.msra.mxu0 0.0
        %1293 = vmatprep.subr.mxu0 0.0
        %1294 = vmatpush2.msra.mxu0 0.0
        %1295 = vmatprep.subr.mxu0 0.0
        %1296 = vmatpush2.msra.mxu0 0.0
        %1297 = vmatprep.subr.mxu0 0.0
        %1298 = vmatpush2.msra.mxu0 0.0
        %1299 = vmatprep.subr.mxu0 0.0
        %1300 = vmatpush2.msra.mxu0 0.0
        %1301 = vmatprep.subr.mxu0 0.0
        %1302 = vmatpush2.msra.mxu0 0.0
        %1303 = vmatprep.subr.mxu0 0.0
        %1304 = vmatpush2.msra.mxu0 0.0
        %1305 = vmatprep.subr.mxu0 0.0
        %1306 = vmatpush2.msra.mxu0 0.0
        %1307 = vmatprep.subr.mxu0 0.0
        %1308 = vmatpush2.msra.mxu0 0.0
        %1309 = vmatprep.subr.mxu0 0.0
        %1310 = vmatpush2.msra.mxu0 0.0
        %1311 = vmatprep.mubr.f32.mxu0 0.0
        %v1312 = vand.u32 %v1244, 4294901760
        %v1313 = vsub.f32 %v1244, %v1312
        %v1314 = vand.u32 %v1313, 4294901760
        %v1315 = vsub.f32 %v1313, %v1314
        %v1316 = vand.u32 %v1315, 4294901760
        %1317 = vmatmul.mubr.f32.gmra.mxu0 %v1316
        %v1318 = vpop.f32.mrf.mxu0
        %v1319 = vadd.f32 0.0, %v1318
        %v1320 = vpop.f32.mrf.mxu0
        %1321 = vdwg.mxu0
        %1322 = vmatprep.subr.mxu0 0.0
        %1323 = vmatpush1.msra.mxu0 0.0
        %1324 = vmatprep.subr.mxu0 0.0
        %1325 = vmatpush1.msra.mxu0 0.0
        %1326 = vmatprep.subr.mxu0 0.0
        %1327 = vmatpush1.msra.mxu0 0.0
        %1328 = vmatprep.subr.mxu0 0.0
        %1329 = vmatpush1.msra.mxu0 0.0
        %1330 = vmatprep.subr.mxu0 0.0
        %1331 = vmatpush1.msra.mxu0 0.0
        %1332 = vmatprep.subr.mxu0 0.0
        %1333 = vmatpush1.msra.mxu0 0.0
        %1334 = vmatprep.subr.mxu0 0.0
        %1335 = vmatpush1.msra.mxu0 0.0
        %1336 = vmatprep.subr.mxu0 0.0
        %1337 = vmatpush1.msra.mxu0 0.0
        %1338 = vmatprep.subr.mxu0 0.0
        %1339 = vmatpush1.msra.mxu0 0.0
        %1340 = vmatprep.subr.mxu0 0.0
        %1341 = vmatpush1.msra.mxu0 0.0
        %1342 = vmatprep.subr.mxu0 0.0
        %1343 = vmatpush1.msra.mxu0 0.0
        %1344 = vmatprep.subr.mxu0 0.0
        %1345 = vmatpush1.msra.mxu0 0.0
        %1346 = vmatprep.subr.mxu0 0.0
        %1347 = vmatpush1.msra.mxu0 0.0
        %1348 = vmatprep.subr.mxu0 0.0
        %1349 = vmatpush1.msra.mxu0 0.0
        %1350 = vmatprep.subr.mxu0 0.0
        %1351 = vmatpush1.msra.mxu0 0.0
        %1352 = vmatprep.subr.mxu0 0.0
        %v1353 = vand.u32 %v1242, 4294901760
        %v1354 = vsub.f32 %v1242, %v1353
        %v1355 = vand.u32 %v1354, 4294901760
        %v1356 = vsub.f32 %v1354, %v1355
        %v1357 = vand.u32 %v1356, 4294901760
        %1358 = vmatpush1.msra.mxu0 %v1357
        %1359 = vmatprep.subr.mxu0 0.0
        %1360 = vmatpush2.msra.mxu0 0.0
        %1361 = vmatprep.subr.mxu0 0.0
        %1362 = vmatpush2.msra.mxu0 0.0
        %1363 = vmatprep.subr.mxu0 0.0
        %1364 = vmatpush2.msra.mxu0 0.0
        %1365 = vmatprep.subr.mxu0 0.0
        %1366 = vmatpush2.msra.mxu0 0.0
        %1367 = vmatprep.subr.mxu0 0.0
        %1368 = vmatpush2.msra.mxu0 0.0
        %1369 = vmatprep.subr.mxu0 0.0
        %1370 = vmatpush2.msra.mxu0 0.0
        %1371 = vmatprep.subr.mxu0 0.0
        %1372 = vmatpush2.msra.mxu0 0.0
        %1373 = vmatprep.subr.mxu0 0.0
        %1374 = vmatpush2.msra.mxu0 0.0
        %1375 = vmatprep.subr.mxu0 0.0
        %1376 = vmatpush2.msra.mxu0 0.0
        %1377 = vmatprep.subr.mxu0 0.0
        %1378 = vmatpush2.msra.mxu0 0.0
        %1379 = vmatprep.subr.mxu0 0.0
        %1380 = vmatpush2.msra.mxu0 0.0
        %1381 = vmatprep.subr.mxu0 0.0
        %1382 = vmatpush2.msra.mxu0 0.0
        %1383 = vmatprep.subr.mxu0 0.0
        %1384 = vmatpush2.msra.mxu0 0.0
        %1385 = vmatprep.subr.mxu0 0.0
        %1386 = vmatpush2.msra.mxu0 0.0
        %1387 = vmatprep.subr.mxu0 0.0
        %1388 = vmatpush2.msra.mxu0 0.0
        %1389 = vmatprep.subr.mxu0 0.0
        %1390 = vmatpush2.msra.mxu0 0.0
        %1391 = vmatprep.mubr.f32.mxu0 0.0
        %v1392 = vand.u32 %v1244, 4294901760
        %1393 = vmatmul.mubr.f32.gmra.mxu0 %v1392
        %v1394 = vpop.f32.mrf.mxu0
        %v1395 = vadd.f32 %v1319, %v1394
        %v1396 = vpop.f32.mrf.mxu0
        %1397 = vdwg.mxu0
        %1398 = vmatprep.subr.mxu0 0.0
        %1399 = vmatpush1.msra.mxu0 0.0
        %1400 = vmatprep.subr.mxu0 0.0
        %1401 = vmatpush1.msra.mxu0 0.0
        %1402 = vmatprep.subr.mxu0 0.0
        %1403 = vmatpush1.msra.mxu0 0.0
        %1404 = vmatprep.subr.mxu0 0.0
        %1405 = vmatpush1.msra.mxu0 0.0
        %1406 = vmatprep.subr.mxu0 0.0
        %1407 = vmatpush1.msra.mxu0 0.0
        %1408 = vmatprep.subr.mxu0 0.0
        %1409 = vmatpush1.msra.mxu0 0.0
        %1410 = vmatprep.subr.mxu0 0.0
        %1411 = vmatpush1.msra.mxu0 0.0
        %1412 = vmatprep.subr.mxu0 0.0
        %1413 = vmatpush1.msra.mxu0 0.0
        %1414 = vmatprep.subr.mxu0 0.0
        %1415 = vmatpush1.msra.mxu0 0.0
        %1416 = vmatprep.subr.mxu0 0.0
        %1417 = vmatpush1.msra.mxu0 0.0
        %1418 = vmatprep.subr.mxu0 0.0
        %1419 = vmatpush1.msra.mxu0 0.0
        %1420 = vmatprep.subr.mxu0 0.0
        %1421 = vmatpush1.msra.mxu0 0.0
        %1422 = vmatprep.subr.mxu0 0.0
        %1423 = vmatpush1.msra.mxu0 0.0
        %1424 = vmatprep.subr.mxu0 0.0
        %1425 = vmatpush1.msra.mxu0 0.0
        %1426 = vmatprep.subr.mxu0 0.0
        %1427 = vmatpush1.msra.mxu0 0.0
        %1428 = vmatprep.subr.mxu0 0.0
        %v1429 = vand.u32 %v1242, 4294901760
        %v1430 = vsub.f32 %v1242, %v1429
        %1431 = vmatpush1.msra.mxu0 %v1430
        %1432 = vmatprep.subr.mxu0 0.0
        %1433 = vmatpush2.msra.mxu0 0.0
        %1434 = vmatprep.subr.mxu0 0.0
        %1435 = vmatpush2.msra.mxu0 0.0
        %1436 = vmatprep.subr.mxu0 0.0
        %1437 = vmatpush2.msra.mxu0 0.0
        %1438 = vmatprep.subr.mxu0 0.0
        %1439 = vmatpush2.msra.mxu0 0.0
        %1440 = vmatprep.subr.mxu0 0.0
        %1441 = vmatpush2.msra.mxu0 0.0
        %1442 = vmatprep.subr.mxu0 0.0
        %1443 = vmatpush2.msra.mxu0 0.0
        %1444 = vmatprep.subr.mxu0 0.0
        %1445 = vmatpush2.msra.mxu0 0.0
        %1446 = vmatprep.subr.mxu0 0.0
        %1447 = vmatpush2.msra.mxu0 0.0
        %1448 = vmatprep.subr.mxu0 0.0
        %1449 = vmatpush2.msra.mxu0 0.0
        %1450 = vmatprep.subr.mxu0 0.0
        %1451 = vmatpush2.msra.mxu0 0.0
        %1452 = vmatprep.subr.mxu0 0.0
        %1453 = vmatpush2.msra.mxu0 0.0
        %1454 = vmatprep.subr.mxu0 0.0
        %1455 = vmatpush2.msra.mxu0 0.0
        %1456 = vmatprep.subr.mxu0 0.0
        %1457 = vmatpush2.msra.mxu0 0.0
        %1458 = vmatprep.subr.mxu0 0.0
        %1459 = vmatpush2.msra.mxu0 0.0
        %1460 = vmatprep.subr.mxu0 0.0
        %1461 = vmatpush2.msra.mxu0 0.0
        %1462 = vmatprep.subr.mxu0 0.0
        %1463 = vmatpush2.msra.mxu0 0.0
        %1464 = vmatprep.mubr.f32.mxu0 0.0
        %v1465 = vand.u32 %v1244, 4294901760
        %v1466 = vsub.f32 %v1244, %v1465
        %1467 = vmatmul.mubr.f32.gmra.mxu0 %v1466
        %v1468 = vpop.f32.mrf.mxu0
        %v1469 = vadd.f32 %v1395, %v1468
        %v1470 = vpop.f32.mrf.mxu0
        %1471 = vdwg.mxu0
        %1472 = vmatprep.subr.mxu0 0.0
        %1473 = vmatpush1.msra.mxu0 0.0
        %1474 = vmatprep.subr.mxu0 0.0
        %1475 = vmatpush1.msra.mxu0 0.0
        %1476 = vmatprep.subr.mxu0 0.0
        %1477 = vmatpush1.msra.mxu0 0.0
        %1478 = vmatprep.subr.mxu0 0.0
        %1479 = vmatpush1.msra.mxu0 0.0
        %1480 = vmatprep.subr.mxu0 0.0
        %1481 = vmatpush1.msra.mxu0 0.0
        %1482 = vmatprep.subr.mxu0 0.0
        %1483 = vmatpush1.msra.mxu0 0.0
        %1484 = vmatprep.subr.mxu0 0.0
        %1485 = vmatpush1.msra.mxu0 0.0
        %1486 = vmatprep.subr.mxu0 0.0
        %1487 = vmatpush1.msra.mxu0 0.0
        %1488 = vmatprep.subr.mxu0 0.0
        %1489 = vmatpush1.msra.mxu0 0.0
        %1490 = vmatprep.subr.mxu0 0.0
        %1491 = vmatpush1.msra.mxu0 0.0
        %1492 = vmatprep.subr.mxu0 0.0
        %1493 = vmatpush1.msra.mxu0 0.0
        %1494 = vmatprep.subr.mxu0 0.0
        %1495 = vmatpush1.msra.mxu0 0.0
        %1496 = vmatprep.subr.mxu0 0.0
        %1497 = vmatpush1.msra.mxu0 0.0
        %1498 = vmatprep.subr.mxu0 0.0
        %1499 = vmatpush1.msra.mxu0 0.0
        %1500 = vmatprep.subr.mxu0 0.0
        %1501 = vmatpush1.msra.mxu0 0.0
        %1502 = vmatprep.subr.mxu0 0.0
        %v1503 = vand.u32 %v1242, 4294901760
        %1504 = vmatpush1.msra.mxu0 %v1503
        %1505 = vmatprep.subr.mxu0 0.0
        %1506 = vmatpush2.msra.mxu0 0.0
        %1507 = vmatprep.subr.mxu0 0.0
        %1508 = vmatpush2.msra.mxu0 0.0
        %1509 = vmatprep.subr.mxu0 0.0
        %1510 = vmatpush2.msra.mxu0 0.0
        %1511 = vmatprep.subr.mxu0 0.0
        %1512 = vmatpush2.msra.mxu0 0.0
        %1513 = vmatprep.subr.mxu0 0.0
        %1514 = vmatpush2.msra.mxu0 0.0
        %1515 = vmatprep.subr.mxu0 0.0
        %1516 = vmatpush2.msra.mxu0 0.0
        %1517 = vmatprep.subr.mxu0 0.0
        %1518 = vmatpush2.msra.mxu0 0.0
        %1519 = vmatprep.subr.mxu0 0.0
        %1520 = vmatpush2.msra.mxu0 0.0
        %1521 = vmatprep.subr.mxu0 0.0
        %1522 = vmatpush2.msra.mxu0 0.0
        %1523 = vmatprep.subr.mxu0 0.0
        %1524 = vmatpush2.msra.mxu0 0.0
        %1525 = vmatprep.subr.mxu0 0.0
        %1526 = vmatpush2.msra.mxu0 0.0
        %1527 = vmatprep.subr.mxu0 0.0
        %1528 = vmatpush2.msra.mxu0 0.0
        %1529 = vmatprep.subr.mxu0 0.0
        %1530 = vmatpush2.msra.mxu0 0.0
        %1531 = vmatprep.subr.mxu0 0.0
        %1532 = vmatpush2.msra.mxu0 0.0
        %1533 = vmatprep.subr.mxu0 0.0
        %1534 = vmatpush2.msra.mxu0 0.0
        %1535 = vmatprep.subr.mxu0 0.0
        %1536 = vmatpush2.msra.mxu0 0.0
        %1537 = vmatprep.mubr.f32.mxu0 0.0
        %v1538 = vand.u32 %v1244, 4294901760
        %v1539 = vsub.f32 %v1244, %v1538
        %v1540 = vand.u32 %v1539, 4294901760
        %1541 = vmatmul.mubr.f32.gmra.mxu0 %v1540
        %v1542 = vpop.f32.mrf.mxu0
        %v1543 = vadd.f32 %v1469, %v1542
        %v1544 = vpop.f32.mrf.mxu0
        %1545 = vdwg.mxu0
        %1546 = vmatprep.subr.mxu0 0.0
        %1547 = vmatpush1.msra.mxu0 0.0
        %1548 = vmatprep.subr.mxu0 0.0
        %1549 = vmatpush1.msra.mxu0 0.0
        %1550 = vmatprep.subr.mxu0 0.0
        %1551 = vmatpush1.msra.mxu0 0.0
        %1552 = vmatprep.subr.mxu0 0.0
        %1553 = vmatpush1.msra.mxu0 0.0
        %1554 = vmatprep.subr.mxu0 0.0
        %1555 = vmatpush1.msra.mxu0 0.0
        %1556 = vmatprep.subr.mxu0 0.0
        %1557 = vmatpush1.msra.mxu0 0.0
        %1558 = vmatprep.subr.mxu0 0.0
        %1559 = vmatpush1.msra.mxu0 0.0
        %1560 = vmatprep.subr.mxu0 0.0
        %1561 = vmatpush1.msra.mxu0 0.0
        %1562 = vmatprep.subr.mxu0 0.0
        %1563 = vmatpush1.msra.mxu0 0.0
        %1564 = vmatprep.subr.mxu0 0.0
        %1565 = vmatpush1.msra.mxu0 0.0
        %1566 = vmatprep.subr.mxu0 0.0
        %1567 = vmatpush1.msra.mxu0 0.0
        %1568 = vmatprep.subr.mxu0 0.0
        %1569 = vmatpush1.msra.mxu0 0.0
        %1570 = vmatprep.subr.mxu0 0.0
        %1571 = vmatpush1.msra.mxu0 0.0
        %1572 = vmatprep.subr.mxu0 0.0
        %1573 = vmatpush1.msra.mxu0 0.0
        %1574 = vmatprep.subr.mxu0 0.0
        %1575 = vmatpush1.msra.mxu0 0.0
        %1576 = vmatprep.subr.mxu0 0.0
        %v1577 = vand.u32 %v1242, 4294901760
        %v1578 = vsub.f32 %v1242, %v1577
        %v1579 = vand.u32 %v1578, 4294901760
        %1580 = vmatpush1.msra.mxu0 %v1579
        %1581 = vmatprep.subr.mxu0 0.0
        %1582 = vmatpush2.msra.mxu0 0.0
        %1583 = vmatprep.subr.mxu0 0.0
        %1584 = vmatpush2.msra.mxu0 0.0
        %1585 = vmatprep.subr.mxu0 0.0
        %1586 = vmatpush2.msra.mxu0 0.0
        %1587 = vmatprep.subr.mxu0 0.0
        %1588 = vmatpush2.msra.mxu0 0.0
        %1589 = vmatprep.subr.mxu0 0.0
        %1590 = vmatpush2.msra.mxu0 0.0
        %1591 = vmatprep.subr.mxu0 0.0
        %1592 = vmatpush2.msra.mxu0 0.0
        %1593 = vmatprep.subr.mxu0 0.0
        %1594 = vmatpush2.msra.mxu0 0.0
        %1595 = vmatprep.subr.mxu0 0.0
        %1596 = vmatpush2.msra.mxu0 0.0
        %1597 = vmatprep.subr.mxu0 0.0
        %1598 = vmatpush2.msra.mxu0 0.0
        %1599 = vmatprep.subr.mxu0 0.0
        %1600 = vmatpush2.msra.mxu0 0.0
        %1601 = vmatprep.subr.mxu0 0.0
        %1602 = vmatpush2.msra.mxu0 0.0
        %1603 = vmatprep.subr.mxu0 0.0
        %1604 = vmatpush2.msra.mxu0 0.0
        %1605 = vmatprep.subr.mxu0 0.0
        %1606 = vmatpush2.msra.mxu0 0.0
        %1607 = vmatprep.subr.mxu0 0.0
        %1608 = vmatpush2.msra.mxu0 0.0
        %1609 = vmatprep.subr.mxu0 0.0
        %1610 = vmatpush2.msra.mxu0 0.0
        %1611 = vmatprep.subr.mxu0 0.0
        %1612 = vmatpush2.msra.mxu0 0.0
        %1613 = vmatprep.mubr.f32.mxu0 0.0
        %v1614 = vand.u32 %v1244, 4294901760
        %1615 = vmatmul.mubr.f32.gmra.mxu0 %v1614
        %v1616 = vpop.f32.mrf.mxu0
        %v1617 = vadd.f32 %v1543, %v1616
        %v1618 = vpop.f32.mrf.mxu0
        %1619 = vdwg.mxu0
        %1620 = vmatprep.subr.mxu0 0.0
        %1621 = vmatpush1.msra.mxu0 0.0
        %1622 = vmatprep.subr.mxu0 0.0
        %1623 = vmatpush1.msra.mxu0 0.0
        %1624 = vmatprep.subr.mxu0 0.0
        %1625 = vmatpush1.msra.mxu0 0.0
        %1626 = vmatprep.subr.mxu0 0.0
        %1627 = vmatpush1.msra.mxu0 0.0
        %1628 = vmatprep.subr.mxu0 0.0
        %1629 = vmatpush1.msra.mxu0 0.0
        %1630 = vmatprep.subr.mxu0 0.0
        %1631 = vmatpush1.msra.mxu0 0.0
        %1632 = vmatprep.subr.mxu0 0.0
        %1633 = vmatpush1.msra.mxu0 0.0
        %1634 = vmatprep.subr.mxu0 0.0
        %1635 = vmatpush1.msra.mxu0 0.0
        %1636 = vmatprep.subr.mxu0 0.0
        %1637 = vmatpush1.msra.mxu0 0.0
        %1638 = vmatprep.subr.mxu0 0.0
        %1639 = vmatpush1.msra.mxu0 0.0
        %1640 = vmatprep.subr.mxu0 0.0
        %1641 = vmatpush1.msra.mxu0 0.0
        %1642 = vmatprep.subr.mxu0 0.0
        %1643 = vmatpush1.msra.mxu0 0.0
        %1644 = vmatprep.subr.mxu0 0.0
        %1645 = vmatpush1.msra.mxu0 0.0
        %1646 = vmatprep.subr.mxu0 0.0
        %1647 = vmatpush1.msra.mxu0 0.0
        %1648 = vmatprep.subr.mxu0 0.0
        %1649 = vmatpush1.msra.mxu0 0.0
        %1650 = vmatprep.subr.mxu0 0.0
        %v1651 = vand.u32 %v1242, 4294901760
        %1652 = vmatpush1.msra.mxu0 %v1651
        %1653 = vmatprep.subr.mxu0 0.0
        %1654 = vmatpush2.msra.mxu0 0.0
        %1655 = vmatprep.subr.mxu0 0.0
        %1656 = vmatpush2.msra.mxu0 0.0
        %1657 = vmatprep.subr.mxu0 0.0
        %1658 = vmatpush2.msra.mxu0 0.0
        %1659 = vmatprep.subr.mxu0 0.0
        %1660 = vmatpush2.msra.mxu0 0.0
        %1661 = vmatprep.subr.mxu0 0.0
        %1662 = vmatpush2.msra.mxu0 0.0
        %1663 = vmatprep.subr.mxu0 0.0
        %1664 = vmatpush2.msra.mxu0 0.0
        %1665 = vmatprep.subr.mxu0 0.0
        %1666 = vmatpush2.msra.mxu0 0.0
        %1667 = vmatprep.subr.mxu0 0.0
        %1668 = vmatpush2.msra.mxu0 0.0
        %1669 = vmatprep.subr.mxu0 0.0
        %1670 = vmatpush2.msra.mxu0 0.0
        %1671 = vmatprep.subr.mxu0 0.0
        %1672 = vmatpush2.msra.mxu0 0.0
        %1673 = vmatprep.subr.mxu0 0.0
        %1674 = vmatpush2.msra.mxu0 0.0
        %1675 = vmatprep.subr.mxu0 0.0
        %1676 = vmatpush2.msra.mxu0 0.0
        %1677 = vmatprep.subr.mxu0 0.0
        %1678 = vmatpush2.msra.mxu0 0.0
        %1679 = vmatprep.subr.mxu0 0.0
        %1680 = vmatpush2.msra.mxu0 0.0
        %1681 = vmatprep.subr.mxu0 0.0
        %1682 = vmatpush2.msra.mxu0 0.0
        %1683 = vmatprep.subr.mxu0 0.0
        %1684 = vmatpush2.msra.mxu0 0.0
        %1685 = vmatprep.mubr.f32.mxu0 0.0
        %v1686 = vand.u32 %v1244, 4294901760
        %1687 = vmatmul.mubr.f32.gmra.mxu0 %v1686
        %v1688 = vpop.f32.mrf.mxu0
        %v1689 = vadd.f32 %v1617, %v1688
        %v1690 = vpop.f32.mrf.mxu0
        %1691 = vdwg.mxu0
        %v1692 = vmul.f32 %v1689, %v1236
        %1693 = vst.msk [vmem:[%s265] sm:$0xff] %vm731, %v1692
        %s1694 = sand.u32 %s146, 1
        %s1695 = scalar_lea.sflag [#allocation4], %s1694
        %s1696 = sand.u32 %s146, 1
        %s1697 = smul.addr %s1696, 8
        %s1698 = scalar_lea.vmem [#allocation7], %s1697
        // Predicated region
        $region49: #{tpu_custom_call.1} parent=39 // pred_check
          %p1699 = pneg %p156
        $region50: #{tpu_custom_call.1} parent=39 // pred_check_branch
          %1701 = sbr.rel (%p1699) target = $region52
        $region51: #{tpu_custom_call.1} parent=39 // pred_region
          %s1703 = ssub.s32 128, 128
          %1704 = vsyncadd %s1695, %s1703
          %s1705 = smul.addr %s23, 128
          %s1706 = scalar_lea.hbm %s5, %s1705
          %s1708 = sshll.u32 %s1698, 4
          %s1709 = int_to_ptr.vmem [resolvable:$true] %s1708
          %1711 = dma.vmem_to_hbm [thread:$0]  %s1709, 128, %s1706, %s1695
        $region52: #{tpu_custom_call.1} parent=39 // pred_fallthru
          _
      $region40: #{tpu_custom_call.1} parent=5 // pred_fallthru
        _
      %p1712 = scmp.le.s32.totalorder 2, %s18
      // Predicated region
      $region53: #{tpu_custom_call.1} parent=5 // pred_check
        %p1713 = pneg %p1712
      $region54: #{tpu_custom_call.1} parent=5 // pred_check_branch
        %1715 = sbr.rel (%p1713) target = $region56
      $region55: #{tpu_custom_call.1} parent=5 // pred_region
        %s1716 = ssub.s32 %s18, 2
        // Predicated region
        $region57: #{tpu_custom_call.1} parent=55 // pred_check
          %p1717 = pneg %p162
        $region58: #{tpu_custom_call.1} parent=55 // pred_check_branch
          %1719 = sbr.rel (%p1717) target = $region60
        $region59: #{tpu_custom_call.1} parent=55 // pred_region
          %s1720 = sand.u32 %s147, 1
          %s1721 = scalar_lea.sflag [#allocation4], %s1720
          %s1722 = sand.u32 %s147, 1
          %s1723 = smul.addr %s1722, 8
          %s1724 = scalar_lea.vmem [#allocation7], %s1723
          %1725 = dma.done %s1721, 128
        $region60: #{tpu_custom_call.1} parent=55 // pred_fallthru
          _
      $region56: #{tpu_custom_call.1} parent=5 // pred_fallthru
        _
    $region6: #{tpu_custom_call.1} parent=1 // loop_footer
      %s22 = sadd.s32 1, %s18
    $region7: #{tpu_custom_call.1} parent=1 // loop_footer_branch
      %17 = sbr.rel target = $region3
    $region8: #{tpu_custom_call.1} parent=1 // loop_exit
      _
    %1726 = vsyncpa [#allocation3], 1
    %s1727 = scalar_lea.sflag [#allocation3], 1
    %1728 = vsyncpa %s1727, 1
    %1729 = vsyncpa [#allocation6], 1
    %1730 = vsyncpa [#allocation4], 1
    %s1731 = scalar_lea.sflag [#allocation4], 1
    %1732 = vsyncpa %s1731, 1

</llo_original>
